<compile_context>
chip_gen: v6e
topology: v6e:2x2x1
jax: 0.10.0
libtpu: 0.0.40
codegen_flags: <defaults>
</compile_context>

<pallas_src>
import functools

import jax
import jax.numpy as jnp
from jax.experimental import pallas as pl
from jax.experimental.pallas import tpu as pltpu

BN_EPS = 1e-5
LEAKY_SLOPE = 0.2


# ----------------------------------------------------------------------------
# Pallas kernels
# ----------------------------------------------------------------------------
def _mm_bias_leaky_kernel(slope, x_ref, w_ref, b_ref, o_ref):
    """(patches @ W + b) with fused LeakyReLU. One M-tile per grid step."""
    acc = jnp.dot(x_ref[...], w_ref[...], preferred_element_type=jnp.float32)
    acc = acc + b_ref[...]                       # (1, Cp) broadcasts
    o_ref[...] = jnp.maximum(acc, slope * acc)   # LeakyReLU, slope in (0,1)


def _mm_stats_kernel(x_ref, w_ref, o_ref, sum_ref, sq_ref):
    """(patches @ W) for BN layers (bias dropped): raw conv output plus
    per-channel sum and sum-of-squares accumulated across the M grid axis."""
    i = pl.program_id(0)
    acc = jnp.dot(x_ref[...], w_ref[...], preferred_element_type=jnp.float32)
    o_ref[...] = acc

    @pl.when(i == 0)
    def _():
        sum_ref[...] = jnp.zeros_like(sum_ref)
        sq_ref[...] = jnp.zeros_like(sq_ref)

    sum_ref[...] += jnp.sum(acc, axis=0, keepdims=True)
    sq_ref[...] += jnp.sum(acc * acc, axis=0, keepdims=True)


def _bn_leaky_kernel(slope, x_ref, scale_ref, shift_ref, o_ref):
    """Per-channel affine (batch-norm) + LeakyReLU."""
    y = x_ref[...] * scale_ref[...] + shift_ref[...]
    o_ref[...] = jnp.maximum(y, slope * y)


# ----------------------------------------------------------------------------
# pallas_call wrappers
# ----------------------------------------------------------------------------
def _pick_tile(m, cap=2048):
    for t in (2048, 1024, 512, 256, 128, 64, 32, 16, 8):
        if t <= cap and m % t == 0:
            return t
    return m


def _round_up(x, m):
    return -(-x // m) * m


def conv_leaky(patches, w_pad, b_pad, slope=LEAKY_SLOPE):
    """patches (M,K) bf16, w_pad (K,Cp) bf16, b_pad (1,Cp) f32 -> (M,Cp) f32."""
    M, K = patches.shape
    Cp = w_pad.shape[1]
    tm = _pick_tile(M)
    return pl.pallas_call(
        functools.partial(_mm_bias_leaky_kernel, slope),
        out_shape=jax.ShapeDtypeStruct((M, Cp), jnp.float32),
        grid=(M // tm,),
        in_specs=[
            pl.BlockSpec((tm, K), lambda i: (i, 0)),
            pl.BlockSpec((K, Cp), lambda i: (0, 0)),
            pl.BlockSpec((1, Cp), lambda i: (0, 0)),
        ],
        out_specs=pl.BlockSpec((tm, Cp), lambda i: (i, 0)),
        compiler_params=pltpu.CompilerParams(dimension_semantics=("parallel",)),
    )(patches, w_pad, b_pad)


def conv_stats(patches, w_pad):
    """patches (M,K) bf16, w_pad (K,Cp) bf16 -> (conv (M,Cp), sum (1,Cp), sq (1,Cp))."""
    M, K = patches.shape
    Cp = w_pad.shape[1]
    tm = _pick_tile(M)
    return pl.pallas_call(
        _mm_stats_kernel,
        out_shape=(
            jax.ShapeDtypeStruct((M, Cp), jnp.float32),
            jax.ShapeDtypeStruct((1, Cp), jnp.float32),
            jax.ShapeDtypeStruct((1, Cp), jnp.float32),
        ),
        grid=(M // tm,),
        in_specs=[
            pl.BlockSpec((tm, K), lambda i: (i, 0)),
            pl.BlockSpec((K, Cp), lambda i: (0, 0)),
        ],
        out_specs=(
            pl.BlockSpec((tm, Cp), lambda i: (i, 0)),
            pl.BlockSpec((1, Cp), lambda i: (0, 0)),   # resident accumulator
            pl.BlockSpec((1, Cp), lambda i: (0, 0)),   # resident accumulator
        ),
        compiler_params=pltpu.CompilerParams(dimension_semantics=("arbitrary",)),
    )(patches, w_pad)


def bn_leaky(x, scale, shift, slope=LEAKY_SLOPE):
    """x (M,Cp) f32, scale/shift (1,Cp) f32 -> (M,Cp) f32."""
    M, C = x.shape
    tm = _pick_tile(M)
    return pl.pallas_call(
        functools.partial(_bn_leaky_kernel, slope),
        out_shape=jax.ShapeDtypeStruct((M, C), jnp.float32),
        grid=(M // tm,),
        in_specs=[
            pl.BlockSpec((tm, C), lambda i: (i, 0)),
            pl.BlockSpec((1, C), lambda i: (0, 0)),
            pl.BlockSpec((1, C), lambda i: (0, 0)),
        ],
        out_specs=pl.BlockSpec((tm, C), lambda i: (i, 0)),
        compiler_params=pltpu.CompilerParams(dimension_semantics=("parallel",)),
    )(x, scale, shift)


# ----------------------------------------------------------------------------
# Plain-JAX glue: im2col patch extraction (NHWC) + weight repacking
# ----------------------------------------------------------------------------
def im2col_nhwc(x, k, stride, pad):
    """x: (N,H,W,C) -> patches (N*OH*OW, k*k*C), feature order (kh, kw, c)."""
    N, H, W, C = x.shape
    xp = jnp.pad(x, ((0, 0), (pad, pad), (pad, pad), (0, 0)))
    OH = (H + 2 * pad - k) // stride + 1
    OW = (W + 2 * pad - k) // stride + 1
    cols = []
    for i in range(k):
        for j in range(k):
            cols.append(xp[:, i:i + stride * OH:stride, j:j + stride * OW:stride, :])
    patches = jnp.stack(cols, axis=3).reshape(N * OH * OW, k * k * C)
    return patches, OH, OW


def conv_weight_to_matmul(w_oihw, c_pad):
    """PyTorch (Cout,Cin,KH,KW) -> (KH*KW*Cin, c_pad), zero-padded lane-dense Cout."""
    Cout, Cin, KH, KW = w_oihw.shape
    w = jnp.transpose(w_oihw, (2, 3, 1, 0)).reshape(KH * KW * Cin, Cout)
    return jnp.pad(w, ((0, 0), (0, c_pad - Cout)))


# ----------------------------------------------------------------------------
# Discriminator forward
# ----------------------------------------------------------------------------
def init_params(key, img_channels, feature_d):
    dims = [img_channels, feature_d, feature_d * 2, feature_d * 4, feature_d * 8, 1]
    params = []
    for li in range(5):
        cin, cout = dims[li], dims[li + 1]
        key, kw, kb = jax.random.split(key, 3)
        w = 0.02 * jax.random.normal(kw, (cout, cin, 4, 4), jnp.float32)
        b = 0.02 * jax.random.normal(kb, (cout,), jnp.float32)
        layer = {"w": w, "b": b}
        if li in (1, 2, 3):  # layers followed by BatchNorm2d
            layer["gamma"] = jnp.ones((cout,), jnp.float32)   # PyTorch default init
            layer["beta"] = jnp.zeros((cout,), jnp.float32)
        params.append(layer)
    return params


def discriminator_forward(params, x_nchw):
    """x_nchw: (N, C, 64, 64) float32 -> (N, 1) float32 (sigmoid probs)."""
    N = x_nchw.shape[0]
    h = jnp.transpose(x_nchw, (0, 2, 3, 1)).astype(jnp.float32)  # NHWC

    specs = [  # (stride, pad, has_bn) for the first 4 conv layers
        (2, 1, False),
        (2, 1, True),
        (2, 1, True),
        (2, 1, True),
    ]

    for li, (stride, pad, has_bn) in enumerate(specs):
        p = params[li]
        cout = p["w"].shape[0]
        cp = _round_up(cout, 128)                      # lane-dense output width
        patches, OH, OW = im2col_nhwc(h, 4, stride, pad)
        patches = patches.astype(jnp.bfloat16)         # bf16 MXU inputs, f32 acc
        w_pad = conv_weight_to_matmul(p["w"], cp).astype(jnp.bfloat16)

        if has_bn:
            # Conv bias dropped: training-mode BN subtracts the batch mean so
            # the bias cancels exactly (zero numerical change).
            out, s, sq = conv_stats(patches, w_pad)
            M = out.shape[0]
            mean = s / M
            var = jnp.maximum(sq / M - mean * mean, 0.0)  # biased var (train-mode BN)
            gamma = jnp.pad(p["gamma"], (0, cp - cout)).reshape(1, cp)
            beta = jnp.pad(p["beta"], (0, cp - cout)).reshape(1, cp)
            scale = gamma * jax.lax.rsqrt(var + BN_EPS)
            shift = beta - mean * scale
            out = bn_leaky(out, scale, shift)
        else:
            b_pad = jnp.pad(p["b"], (0, cp - cout)).reshape(1, cp).astype(jnp.float32)
            out = conv_leaky(patches, w_pad, b_pad)

        h = out[:, :cout].reshape(N, OH, OW, cout)

    # Final layer: Conv 4x4, stride 1, pad 0, Cout=1 on a 4x4 map -> (N,1,1,1).
    # M=N, K=16*feature_d*8: far too small for a pallas_call; plain XLA dot.
    p = params[4]
    patches, _, _ = im2col_nhwc(h, 4, 1, 0)                      # (N, 16*C)
    w_mat = conv_weight_to_matmul(p["w"], p["w"].shape[0])       # (16*C, 1)
    logits = patches @ w_mat + p["b"].reshape(1, 1)
    return jax.nn.sigmoid(logits).reshape(-1, 1)


# ----------------------------------------------------------------------------
if __name__ == "__main__":
    IMG_CHANNELS = 3
    FEATURE_D = 8
    BATCH = 2
    SPATIAL = 64  # DCGAN discriminator geometry requires 64x64 for a 1x1 output

    key = jax.random.PRNGKey(0)
    k_params, k_x = jax.random.split(key)
    params = init_params(k_params, IMG_CHANNELS, FEATURE_D)
    x = jax.random.normal(k_x, (BATCH, IMG_CHANNELS, SPATIAL, SPATIAL), jnp.float32)

    out = discriminator_forward(params, x)
    out = jax.block_until_ready(out)
    assert out.shape == (BATCH, 1)
    assert bool(jnp.all((out >= 0.0) & (out <= 1.0)))
    print("KERNEL_OK")
</pallas_src>

<mosaic_0001>
module attributes {stable_mosaic.version = 11 : i64} {
  func.func @_mm_bias_leaky_kernel(%arg0: i32, %arg1: memref<2048x48xbf16, #tpu.memory_space<vmem>>, %arg2: memref<48x128xbf16, #tpu.memory_space<vmem>>, %arg3: memref<1x128xf32, #tpu.memory_space<vmem>>, %arg4: memref<2048x128xf32, #tpu.memory_space<vmem>>) attributes {dimension_semantics = [#tpu.dimension_semantics<parallel>], iteration_bounds = array<i64: 1>, scalar_prefetch = 0 : i64, scratch_operands = 0 : i64, tpu.core_type = #tpu.core_type<tc>, window_params = [{transform_indices = @transform_0, window_bounds = array<i64: 2048, 48>}, {pipeline_mode = #tpu.pipeline_mode<synchronous>, transform_indices = @transform_1, window_bounds = array<i64: 48, 128>}, {pipeline_mode = #tpu.pipeline_mode<synchronous>, transform_indices = @transform_2, window_bounds = array<i64: 1, 128>}, {transform_indices = @transform_3, window_bounds = array<i64: 2048, 128>}]} {
    %c0 = arith.constant 0 : index
    %c0_0 = arith.constant 0 : index
    %0 = vector.load %arg1[%c0, %c0_0] : memref<2048x48xbf16, #tpu.memory_space<vmem>>, vector<2048x48xbf16>
    %c0_1 = arith.constant 0 : index
    %c0_2 = arith.constant 0 : index
    %1 = vector.load %arg2[%c0_1, %c0_2] : memref<48x128xbf16, #tpu.memory_space<vmem>>, vector<48x128xbf16>
    %cst = arith.constant dense<0.000000e+00> : vector<2048x128xf32>
    %2 = tpu.matmul %0, %1, %cst {dimension_numbers = #tpu.dot_dimension_numbers<[1], [0], [0], [1], [0, 0, 1, 1], [], []>} : vector<2048x48xbf16>, vector<48x128xbf16>, vector<2048x128xf32> -> vector<2048x128xf32>
    %c0_3 = arith.constant 0 : index
    %c0_4 = arith.constant 0 : index
    %3 = vector.load %arg3[%c0_3, %c0_4] : memref<1x128xf32, #tpu.memory_space<vmem>>, vector<1x128xf32>
    %4 = vector.broadcast %3 : vector<1x128xf32> to vector<2048x128xf32>
    %5 = arith.addf %2, %4 : vector<2048x128xf32>
    %cst_5 = arith.constant 2.000000e-01 : f32
    %6 = vector.broadcast %cst_5 : f32 to vector<2048x128xf32>
    %7 = arith.mulf %6, %5 : vector<2048x128xf32>
    %8 = arith.maximumf %5, %7 : vector<2048x128xf32>
    %c0_6 = arith.constant 0 : index
    %c0_7 = arith.constant 0 : index
    %9 = vector.load %arg4[%c0_6, %c0_7] : memref<2048x128xf32, #tpu.memory_space<vmem>>, vector<2048x128xf32>
    tpu.vector_store %arg4[%c0_6, %c0_7], %8 {strides = array<i32>} : memref<2048x128xf32, #tpu.memory_space<vmem>>, vector<2048x128xf32>,
    return
  }
  func.func @transform_0(%arg0: i32) -> (i32, i32) {
    %c0_i32 = arith.constant 0 : i32
    %c0_i32_0 = arith.constant 0 : i32
    return %arg0, %c0_i32 : i32, i32
  }
  func.func @transform_1(%arg0: i32) -> (i32, i32) {
    %c0_i32 = arith.constant 0 : i32
    %c0_i32_0 = arith.constant 0 : i32
    %c0_i32_1 = arith.constant 0 : i32
    return %c0_i32, %c0_i32_0 : i32, i32
  }
  func.func @transform_2(%arg0: i32) -> (i32, i32) {
    %c0_i32 = arith.constant 0 : i32
    %c0_i32_0 = arith.constant 0 : i32
    %c0_i32_1 = arith.constant 0 : i32
    return %c0_i32, %c0_i32_0 : i32, i32
  }
  func.func @transform_3(%arg0: i32) -> (i32, i32) {
    %c0_i32 = arith.constant 0 : i32
    %c0_i32_0 = arith.constant 0 : i32
    return %arg0, %c0_i32 : i32, i32
  }
}

</mosaic_0001>

<llo_original>
// kernel: tpu_custom_call.1
$region0: #{tpu_custom_call.1}
  #allocation0 [shape = 'u32[]', space=smem, size = 0x4, offset = 0x4, fixed_abs, tag = 'smem constant byte address 0x4 - core index']
  #allocation1 [shape = 'u32[144,128]{1,0:T(1,128)}', space=vmem, size = 0x12000, scoped, tag = 'internal scratch']
  %s0 = inlined_call_operand.vmem [shape: bf16[2048,48], index: 0, kind: input, shape index: {}]
  %s1 = inlined_call_operand.vmem [shape: bf16[48,128], index: 1, kind: input, shape index: {}]
  %s2 = inlined_call_operand.vmem [shape: f32[1,128], index: 2, kind: input, shape index: {}]
  %s3 = inlined_call_operand.hbm [shape: f32[2048,128], index: 3, kind: output, shape index: {}]
  %s4 = sld [smem:[#allocation0]]
  $region22: #{tpu_custom_call.1} parent=0
    _
  %s6 = ssub.s32 1, %s4
  %s7 = scalar_select 0, %s6, %s4
  $region1: #{tpu_custom_call.1} parent=0
    #allocation2 [shape = 'u8[1048576]{0}', space=vmem, size = 0x100000, scoped, tag = 'output window, operand 0, single buffered']
    #allocation3 [shape = 's32[1]{0}', space=sflag, size = 0x4, scoped, tag = 'scoped memory for tpu_custom_call.1']
    %8 = vsyncpa [#allocation3], 0
    // Predicated region
    $region2: #{tpu_custom_call.1} parent=1 // pred_check
      _
    $region3: #{tpu_custom_call.1} parent=1 // pred_check_branch
      %10 = sbr.rel (0) target = $region5
    $region4: #{tpu_custom_call.1} parent=1 // pred_region
      _
    $region5: #{tpu_custom_call.1} parent=1 // pred_fallthru
      _
    // Predicated region
    $region6: #{tpu_custom_call.1} parent=1 // pred_check
      _
    $region7: #{tpu_custom_call.1} parent=1 // pred_check_branch
      %12 = sbr.rel (0) target = $region9
    $region8: #{tpu_custom_call.1} parent=1 // pred_region
      _
    $region9: #{tpu_custom_call.1} parent=1 // pred_fallthru
      _
    // Predicated region
    $region10: #{tpu_custom_call.1} parent=1 // pred_check
      _
    $region11: #{tpu_custom_call.1} parent=1 // pred_check_branch
      %14 = sbr.rel (0) target = $region13
    $region12: #{tpu_custom_call.1} parent=1 // pred_region
      _
    $region13: #{tpu_custom_call.1} parent=1 // pred_fallthru
      _
    %v16 = vld [vmem:[%s0] sm:$0xf]
    %v17 = vld [vmem:[%s0 + $0x4] sm:$0xf]
    %v18 = vld [vmem:[%s0 + $0x8] sm:$0xf]
    %v19 = vld [vmem:[%s0 + $0xc] sm:$0xf]
    %v20 = vld [vmem:[%s0 + $0x10] sm:$0xf]
    %v21 = vld [vmem:[%s0 + $0x14] sm:$0xf]
    %v22 = vld [vmem:[%s0 + $0x18] sm:$0xf]
    %v23 = vld [vmem:[%s0 + $0x1c] sm:$0xf]
    %v24 = vld [vmem:[%s0 + $0x20] sm:$0xf]
    %v25 = vld [vmem:[%s0 + $0x24] sm:$0xf]
    %v26 = vld [vmem:[%s0 + $0x28] sm:$0xf]
    %v27 = vld [vmem:[%s0 + $0x2c] sm:$0xf]
    %v28 = vld [vmem:[%s0 + $0x30] sm:$0xf]
    %v29 = vld [vmem:[%s0 + $0x34] sm:$0xf]
    %v30 = vld [vmem:[%s0 + $0x38] sm:$0xf]
    %v31 = vld [vmem:[%s0 + $0x3c] sm:$0xf]
    %v32 = vld [vmem:[%s0 + $0x40] sm:$0xf]
    %v33 = vld [vmem:[%s0 + $0x44] sm:$0xf]
    %v34 = vld [vmem:[%s0 + $0x48] sm:$0xf]
    %v35 = vld [vmem:[%s0 + $0x4c] sm:$0xf]
    %v36 = vld [vmem:[%s0 + $0x50] sm:$0xf]
    %v37 = vld [vmem:[%s0 + $0x54] sm:$0xf]
    %v38 = vld [vmem:[%s0 + $0x58] sm:$0xf]
    %v39 = vld [vmem:[%s0 + $0x5c] sm:$0xf]
    %v40 = vld [vmem:[%s0 + $0x60] sm:$0xf]
    %v41 = vld [vmem:[%s0 + $0x64] sm:$0xf]
    %v42 = vld [vmem:[%s0 + $0x68] sm:$0xf]
    %v43 = vld [vmem:[%s0 + $0x6c] sm:$0xf]
    %v44 = vld [vmem:[%s0 + $0x70] sm:$0xf]
    %v45 = vld [vmem:[%s0 + $0x74] sm:$0xf]
    %v46 = vld [vmem:[%s0 + $0x78] sm:$0xf]
    %v47 = vld [vmem:[%s0 + $0x7c] sm:$0xf]
    %v48 = vld [vmem:[%s0 + $0x80] sm:$0xf]
    %v49 = vld [vmem:[%s0 + $0x84] sm:$0xf]
    %v50 = vld [vmem:[%s0 + $0x88] sm:$0xf]
    %v51 = vld [vmem:[%s0 + $0x8c] sm:$0xf]
    %v52 = vld [vmem:[%s0 + $0x90] sm:$0xf]
    %v53 = vld [vmem:[%s0 + $0x94] sm:$0xf]
    %v54 = vld [vmem:[%s0 + $0x98] sm:$0xf]
    %v55 = vld [vmem:[%s0 + $0x9c] sm:$0xf]
    %v56 = vld [vmem:[%s0 + $0xa0] sm:$0xf]
    %v57 = vld [vmem:[%s0 + $0xa4] sm:$0xf]
    %v58 = vld [vmem:[%s0 + $0xa8] sm:$0xf]
    %v59 = vld [vmem:[%s0 + $0xac] sm:$0xf]
    %v60 = vld [vmem:[%s0 + $0xb0] sm:$0xf]
    %v61 = vld [vmem:[%s0 + $0xb4] sm:$0xf]
    %v62 = vld [vmem:[%s0 + $0xb8] sm:$0xf]
    %v63 = vld [vmem:[%s0 + $0xbc] sm:$0xf]
    %v64 = vld [vmem:[%s0 + $0xc0] sm:$0xf]
    %v65 = vld [vmem:[%s0 + $0xc4] sm:$0xf]
    %v66 = vld [vmem:[%s0 + $0xc8] sm:$0xf]
    %v67 = vld [vmem:[%s0 + $0xcc] sm:$0xf]
    %v68 = vld [vmem:[%s0 + $0xd0] sm:$0xf]
    %v69 = vld [vmem:[%s0 + $0xd4] sm:$0xf]
    %v70 = vld [vmem:[%s0 + $0xd8] sm:$0xf]
    %v71 = vld [vmem:[%s0 + $0xdc] sm:$0xf]
    %v72 = vld [vmem:[%s0 + $0xe0] sm:$0xf]
    %v73 = vld [vmem:[%s0 + $0xe4] sm:$0xf]
    %v74 = vld [vmem:[%s0 + $0xe8] sm:$0xf]
    %v75 = vld [vmem:[%s0 + $0xec] sm:$0xf]
    %v76 = vld [vmem:[%s0 + $0xf0] sm:$0xf]
    %v77 = vld [vmem:[%s0 + $0xf4] sm:$0xf]
    %v78 = vld [vmem:[%s0 + $0xf8] sm:$0xf]
    %v79 = vld [vmem:[%s0 + $0xfc] sm:$0xf]
    %v80 = vld [vmem:[%s0 + $0x100] sm:$0xf]
    %v81 = vld [vmem:[%s0 + $0x104] sm:$0xf]
    %v82 = vld [vmem:[%s0 + $0x108] sm:$0xf]
    %v83 = vld [vmem:[%s0 + $0x10c] sm:$0xf]
    %v84 = vld [vmem:[%s0 + $0x110] sm:$0xf]
    %v85 = vld [vmem:[%s0 + $0x114] sm:$0xf]
    %v86 = vld [vmem:[%s0 + $0x118] sm:$0xf]
    %v87 = vld [vmem:[%s0 + $0x11c] sm:$0xf]
    %v88 = vld [vmem:[%s0 + $0x120] sm:$0xf]
    %v89 = vld [vmem:[%s0 + $0x124] sm:$0xf]
    %v90 = vld [vmem:[%s0 + $0x128] sm:$0xf]
    %v91 = vld [vmem:[%s0 + $0x12c] sm:$0xf]
    %v92 = vld [vmem:[%s0 + $0x130] sm:$0xf]
    %v93 = vld [vmem:[%s0 + $0x134] sm:$0xf]
    %v94 = vld [vmem:[%s0 + $0x138] sm:$0xf]
    %v95 = vld [vmem:[%s0 + $0x13c] sm:$0xf]
    %v96 = vld [vmem:[%s0 + $0x140] sm:$0xf]
    %v97 = vld [vmem:[%s0 + $0x144] sm:$0xf]
    %v98 = vld [vmem:[%s0 + $0x148] sm:$0xf]
    %v99 = vld [vmem:[%s0 + $0x14c] sm:$0xf]
    %v100 = vld [vmem:[%s0 + $0x150] sm:$0xf]
    %v101 = vld [vmem:[%s0 + $0x154] sm:$0xf]
    %v102 = vld [vmem:[%s0 + $0x158] sm:$0xf]
    %v103 = vld [vmem:[%s0 + $0x15c] sm:$0xf]
    %v104 = vld [vmem:[%s0 + $0x160] sm:$0xf]
    %v105 = vld [vmem:[%s0 + $0x164] sm:$0xf]
    %v106 = vld [vmem:[%s0 + $0x168] sm:$0xf]
    %v107 = vld [vmem:[%s0 + $0x16c] sm:$0xf]
    %v108 = vld [vmem:[%s0 + $0x170] sm:$0xf]
    %v109 = vld [vmem:[%s0 + $0x174] sm:$0xf]
    %v110 = vld [vmem:[%s0 + $0x178] sm:$0xf]
    %v111 = vld [vmem:[%s0 + $0x17c] sm:$0xf]
    %v112 = vld [vmem:[%s0 + $0x180] sm:$0xf]
    %v113 = vld [vmem:[%s0 + $0x184] sm:$0xf]
    %v114 = vld [vmem:[%s0 + $0x188] sm:$0xf]
    %v115 = vld [vmem:[%s0 + $0x18c] sm:$0xf]
    %v116 = vld [vmem:[%s0 + $0x190] sm:$0xf]
    %v117 = vld [vmem:[%s0 + $0x194] sm:$0xf]
    %v118 = vld [vmem:[%s0 + $0x198] sm:$0xf]
    %v119 = vld [vmem:[%s0 + $0x19c] sm:$0xf]
    %v120 = vld [vmem:[%s0 + $0x1a0] sm:$0xf]
    %v121 = vld [vmem:[%s0 + $0x1a4] sm:$0xf]
    %v122 = vld [vmem:[%s0 + $0x1a8] sm:$0xf]
    %v123 = vld [vmem:[%s0 + $0x1ac] sm:$0xf]
    %v124 = vld [vmem:[%s0 + $0x1b0] sm:$0xf]
    %v125 = vld [vmem:[%s0 + $0x1b4] sm:$0xf]
    %v126 = vld [vmem:[%s0 + $0x1b8] sm:$0xf]
    %v127 = vld [vmem:[%s0 + $0x1bc] sm:$0xf]
    %v128 = vld [vmem:[%s0 + $0x1c0] sm:$0xf]
    %v129 = vld [vmem:[%s0 + $0x1c4] sm:$0xf]
    %v130 = vld [vmem:[%s0 + $0x1c8] sm:$0xf]
    %v131 = vld [vmem:[%s0 + $0x1cc] sm:$0xf]
    %v132 = vld [vmem:[%s0 + $0x1d0] sm:$0xf]
    %v133 = vld [vmem:[%s0 + $0x1d4] sm:$0xf]
    %v134 = vld [vmem:[%s0 + $0x1d8] sm:$0xf]
    %v135 = vld [vmem:[%s0 + $0x1dc] sm:$0xf]
    %v136 = vld [vmem:[%s0 + $0x1e0] sm:$0xf]
    %v137 = vld [vmem:[%s0 + $0x1e4] sm:$0xf]
    %v138 = vld [vmem:[%s0 + $0x1e8] sm:$0xf]
    %v139 = vld [vmem:[%s0 + $0x1ec] sm:$0xf]
    %v140 = vld [vmem:[%s0 + $0x1f0] sm:$0xf]
    %v141 = vld [vmem:[%s0 + $0x1f4] sm:$0xf]
    %v142 = vld [vmem:[%s0 + $0x1f8] sm:$0xf]
    %v143 = vld [vmem:[%s0 + $0x1fc] sm:$0xf]
    %v144 = vld [vmem:[%s0 + $0x200] sm:$0xf]
    %v145 = vld [vmem:[%s0 + $0x204] sm:$0xf]
    %v146 = vld [vmem:[%s0 + $0x208] sm:$0xf]
    %v147 = vld [vmem:[%s0 + $0x20c] sm:$0xf]
    %v148 = vld [vmem:[%s0 + $0x210] sm:$0xf]
    %v149 = vld [vmem:[%s0 + $0x214] sm:$0xf]
    %v150 = vld [vmem:[%s0 + $0x218] sm:$0xf]
    %v151 = vld [vmem:[%s0 + $0x21c] sm:$0xf]
    %v152 = vld [vmem:[%s0 + $0x220] sm:$0xf]
    %v153 = vld [vmem:[%s0 + $0x224] sm:$0xf]
    %v154 = vld [vmem:[%s0 + $0x228] sm:$0xf]
    %v155 = vld [vmem:[%s0 + $0x22c] sm:$0xf]
    %v156 = vld [vmem:[%s0 + $0x230] sm:$0xf]
    %v157 = vld [vmem:[%s0 + $0x234] sm:$0xf]
    %v158 = vld [vmem:[%s0 + $0x238] sm:$0xf]
    %v159 = vld [vmem:[%s0 + $0x23c] sm:$0xf]
    %v160 = vld [vmem:[%s0 + $0x240] sm:$0xf]
    %v161 = vld [vmem:[%s0 + $0x244] sm:$0xf]
    %v162 = vld [vmem:[%s0 + $0x248] sm:$0xf]
    %v163 = vld [vmem:[%s0 + $0x24c] sm:$0xf]
    %v164 = vld [vmem:[%s0 + $0x250] sm:$0xf]
    %v165 = vld [vmem:[%s0 + $0x254] sm:$0xf]
    %v166 = vld [vmem:[%s0 + $0x258] sm:$0xf]
    %v167 = vld [vmem:[%s0 + $0x25c] sm:$0xf]
    %v168 = vld [vmem:[%s0 + $0x260] sm:$0xf]
    %v169 = vld [vmem:[%s0 + $0x264] sm:$0xf]
    %v170 = vld [vmem:[%s0 + $0x268] sm:$0xf]
    %v171 = vld [vmem:[%s0 + $0x26c] sm:$0xf]
    %v172 = vld [vmem:[%s0 + $0x270] sm:$0xf]
    %v173 = vld [vmem:[%s0 + $0x274] sm:$0xf]
    %v174 = vld [vmem:[%s0 + $0x278] sm:$0xf]
    %v175 = vld [vmem:[%s0 + $0x27c] sm:$0xf]
    %v176 = vld [vmem:[%s0 + $0x280] sm:$0xf]
    %v177 = vld [vmem:[%s0 + $0x284] sm:$0xf]
    %v178 = vld [vmem:[%s0 + $0x288] sm:$0xf]
    %v179 = vld [vmem:[%s0 + $0x28c] sm:$0xf]
    %v180 = vld [vmem:[%s0 + $0x290] sm:$0xf]
    %v181 = vld [vmem:[%s0 + $0x294] sm:$0xf]
    %v182 = vld [vmem:[%s0 + $0x298] sm:$0xf]
    %v183 = vld [vmem:[%s0 + $0x29c] sm:$0xf]
    %v184 = vld [vmem:[%s0 + $0x2a0] sm:$0xf]
    %v185 = vld [vmem:[%s0 + $0x2a4] sm:$0xf]
    %v186 = vld [vmem:[%s0 + $0x2a8] sm:$0xf]
    %v187 = vld [vmem:[%s0 + $0x2ac] sm:$0xf]
    %v188 = vld [vmem:[%s0 + $0x2b0] sm:$0xf]
    %v189 = vld [vmem:[%s0 + $0x2b4] sm:$0xf]
    %v190 = vld [vmem:[%s0 + $0x2b8] sm:$0xf]
    %v191 = vld [vmem:[%s0 + $0x2bc] sm:$0xf]
    %v192 = vld [vmem:[%s0 + $0x2c0] sm:$0xf]
    %v193 = vld [vmem:[%s0 + $0x2c4] sm:$0xf]
    %v194 = vld [vmem:[%s0 + $0x2c8] sm:$0xf]
    %v195 = vld [vmem:[%s0 + $0x2cc] sm:$0xf]
    %v196 = vld [vmem:[%s0 + $0x2d0] sm:$0xf]
    %v197 = vld [vmem:[%s0 + $0x2d4] sm:$0xf]
    %v198 = vld [vmem:[%s0 + $0x2d8] sm:$0xf]
    %v199 = vld [vmem:[%s0 + $0x2dc] sm:$0xf]
    %v200 = vld [vmem:[%s0 + $0x2e0] sm:$0xf]
    %v201 = vld [vmem:[%s0 + $0x2e4] sm:$0xf]
    %v202 = vld [vmem:[%s0 + $0x2e8] sm:$0xf]
    %v203 = vld [vmem:[%s0 + $0x2ec] sm:$0xf]
    %v204 = vld [vmem:[%s0 + $0x2f0] sm:$0xf]
    %v205 = vld [vmem:[%s0 + $0x2f4] sm:$0xf]
    %v206 = vld [vmem:[%s0 + $0x2f8] sm:$0xf]
    %v207 = vld [vmem:[%s0 + $0x2fc] sm:$0xf]
    %v208 = vld [vmem:[%s0 + $0x300] sm:$0xf]
    %v209 = vld [vmem:[%s0 + $0x304] sm:$0xf]
    %v210 = vld [vmem:[%s0 + $0x308] sm:$0xf]
    %v211 = vld [vmem:[%s0 + $0x30c] sm:$0xf]
    %v212 = vld [vmem:[%s0 + $0x310] sm:$0xf]
    %v213 = vld [vmem:[%s0 + $0x314] sm:$0xf]
    %v214 = vld [vmem:[%s0 + $0x318] sm:$0xf]
    %v215 = vld [vmem:[%s0 + $0x31c] sm:$0xf]
    %v216 = vld [vmem:[%s0 + $0x320] sm:$0xf]
    %v217 = vld [vmem:[%s0 + $0x324] sm:$0xf]
    %v218 = vld [vmem:[%s0 + $0x328] sm:$0xf]
    %v219 = vld [vmem:[%s0 + $0x32c] sm:$0xf]
    %v220 = vld [vmem:[%s0 + $0x330] sm:$0xf]
    %v221 = vld [vmem:[%s0 + $0x334] sm:$0xf]
    %v222 = vld [vmem:[%s0 + $0x338] sm:$0xf]
    %v223 = vld [vmem:[%s0 + $0x33c] sm:$0xf]
    %v224 = vld [vmem:[%s0 + $0x340] sm:$0xf]
    %v225 = vld [vmem:[%s0 + $0x344] sm:$0xf]
    %v226 = vld [vmem:[%s0 + $0x348] sm:$0xf]
    %v227 = vld [vmem:[%s0 + $0x34c] sm:$0xf]
    %v228 = vld [vmem:[%s0 + $0x350] sm:$0xf]
    %v229 = vld [vmem:[%s0 + $0x354] sm:$0xf]
    %v230 = vld [vmem:[%s0 + $0x358] sm:$0xf]
    %v231 = vld [vmem:[%s0 + $0x35c] sm:$0xf]
    %v232 = vld [vmem:[%s0 + $0x360] sm:$0xf]
    %v233 = vld [vmem:[%s0 + $0x364] sm:$0xf]
    %v234 = vld [vmem:[%s0 + $0x368] sm:$0xf]
    %v235 = vld [vmem:[%s0 + $0x36c] sm:$0xf]
    %v236 = vld [vmem:[%s0 + $0x370] sm:$0xf]
    %v237 = vld [vmem:[%s0 + $0x374] sm:$0xf]
    %v238 = vld [vmem:[%s0 + $0x378] sm:$0xf]
    %v239 = vld [vmem:[%s0 + $0x37c] sm:$0xf]
    %v240 = vld [vmem:[%s0 + $0x380] sm:$0xf]
    %v241 = vld [vmem:[%s0 + $0x384] sm:$0xf]
    %v242 = vld [vmem:[%s0 + $0x388] sm:$0xf]
    %v243 = vld [vmem:[%s0 + $0x38c] sm:$0xf]
    %v244 = vld [vmem:[%s0 + $0x390] sm:$0xf]
    %v245 = vld [vmem:[%s0 + $0x394] sm:$0xf]
    %v246 = vld [vmem:[%s0 + $0x398] sm:$0xf]
    %v247 = vld [vmem:[%s0 + $0x39c] sm:$0xf]
    %v248 = vld [vmem:[%s0 + $0x3a0] sm:$0xf]
    %v249 = vld [vmem:[%s0 + $0x3a4] sm:$0xf]
    %v250 = vld [vmem:[%s0 + $0x3a8] sm:$0xf]
    %v251 = vld [vmem:[%s0 + $0x3ac] sm:$0xf]
    %v252 = vld [vmem:[%s0 + $0x3b0] sm:$0xf]
    %v253 = vld [vmem:[%s0 + $0x3b4] sm:$0xf]
    %v254 = vld [vmem:[%s0 + $0x3b8] sm:$0xf]
    %v255 = vld [vmem:[%s0 + $0x3bc] sm:$0xf]
    %v256 = vld [vmem:[%s0 + $0x3c0] sm:$0xf]
    %v257 = vld [vmem:[%s0 + $0x3c4] sm:$0xf]
    %v258 = vld [vmem:[%s0 + $0x3c8] sm:$0xf]
    %v259 = vld [vmem:[%s0 + $0x3cc] sm:$0xf]
    %v260 = vld [vmem:[%s0 + $0x3d0] sm:$0xf]
    %v261 = vld [vmem:[%s0 + $0x3d4] sm:$0xf]
    %v262 = vld [vmem:[%s0 + $0x3d8] sm:$0xf]
    %v263 = vld [vmem:[%s0 + $0x3dc] sm:$0xf]
    %v264 = vld [vmem:[%s0 + $0x3e0] sm:$0xf]
    %v265 = vld [vmem:[%s0 + $0x3e4] sm:$0xf]
    %v266 = vld [vmem:[%s0 + $0x3e8] sm:$0xf]
    %v267 = vld [vmem:[%s0 + $0x3ec] sm:$0xf]
    %v268 = vld [vmem:[%s0 + $0x3f0] sm:$0xf]
    %v269 = vld [vmem:[%s0 + $0x3f4] sm:$0xf]
    %v270 = vld [vmem:[%s0 + $0x3f8] sm:$0xf]
    %v271 = vld [vmem:[%s0 + $0x3fc] sm:$0xf]
    %v272 = vld [vmem:[%s1] sm:$0xf]
    %v273 = vld [vmem:[%s1 + $0x4] sm:$0xf]
    %v274 = vld [vmem:[%s1 + $0x8] sm:$0xf]
    %v275 = vld [vmem:[%s1 + $0xc] sm:$0xf]
    %v276 = vld [vmem:[%s1 + $0x10] sm:$0xf]
    %v277 = vld [vmem:[%s1 + $0x14] sm:$0xf]
    %v278 = vld [vmem:[%s2] sm:$0x1]
    %v280 = vlaneseq
    %v281 = vshrl.u32 %v280, 7
    %v282 = vsub.s32 0, %v281
    %v283 = vrot.slane %v278, %v282
    %v541 = vunpack.c.l.b16 %v16
    %v542 = vunpack.c.l.b16 %v17
    %v543 = vunpack.c.l.b16 %v18
    %v544 = vunpack.c.l.b16 %v19
    %v545 = vunpack.c.l.b16 %v20
    %v546 = vunpack.c.l.b16 %v21
    %v547 = vunpack.c.l.b16 %v22
    %v548 = vunpack.c.l.b16 %v23
    %v549 = vunpack.c.l.b16 %v24
    %v550 = vunpack.c.l.b16 %v25
    %v551 = vunpack.c.l.b16 %v26
    %v552 = vunpack.c.l.b16 %v27
    %v553 = vunpack.c.l.b16 %v28
    %v554 = vunpack.c.l.b16 %v29
    %v555 = vunpack.c.l.b16 %v30
    %v556 = vunpack.c.l.b16 %v31
    %v557 = vunpack.c.l.b16 %v32
    %v558 = vunpack.c.l.b16 %v33
    %v559 = vunpack.c.l.b16 %v34
    %v560 = vunpack.c.l.b16 %v35
    %v561 = vunpack.c.l.b16 %v36
    %v562 = vunpack.c.l.b16 %v37
    %v563 = vunpack.c.l.b16 %v38
    %v564 = vunpack.c.l.b16 %v39
    %v565 = vunpack.c.l.b16 %v40
    %v566 = vunpack.c.l.b16 %v41
    %v567 = vunpack.c.l.b16 %v42
    %v568 = vunpack.c.l.b16 %v43
    %v569 = vunpack.c.l.b16 %v44
    %v570 = vunpack.c.l.b16 %v45
    %v571 = vunpack.c.l.b16 %v46
    %v572 = vunpack.c.l.b16 %v47
    %v573 = vunpack.c.l.b16 %v48
    %v574 = vunpack.c.l.b16 %v49
    %v575 = vunpack.c.l.b16 %v50
    %v576 = vunpack.c.l.b16 %v51
    %v577 = vunpack.c.l.b16 %v52
    %v578 = vunpack.c.l.b16 %v53
    %v579 = vunpack.c.l.b16 %v54
    %v580 = vunpack.c.l.b16 %v55
    %v581 = vunpack.c.l.b16 %v56
    %v582 = vunpack.c.l.b16 %v57
    %v583 = vunpack.c.l.b16 %v58
    %v584 = vunpack.c.l.b16 %v59
    %v585 = vunpack.c.l.b16 %v60
    %v586 = vunpack.c.l.b16 %v61
    %v587 = vunpack.c.l.b16 %v62
    %v588 = vunpack.c.l.b16 %v63
    %v589 = vunpack.c.l.b16 %v64
    %v590 = vunpack.c.l.b16 %v65
    %v591 = vunpack.c.l.b16 %v66
    %v592 = vunpack.c.l.b16 %v67
    %v593 = vunpack.c.l.b16 %v68
    %v594 = vunpack.c.l.b16 %v69
    %v595 = vunpack.c.l.b16 %v70
    %v596 = vunpack.c.l.b16 %v71
    %v597 = vunpack.c.l.b16 %v72
    %v598 = vunpack.c.l.b16 %v73
    %v599 = vunpack.c.l.b16 %v74
    %v600 = vunpack.c.l.b16 %v75
    %v601 = vunpack.c.l.b16 %v76
    %v602 = vunpack.c.l.b16 %v77
    %v603 = vunpack.c.l.b16 %v78
    %v604 = vunpack.c.l.b16 %v79
    %v605 = vunpack.c.l.b16 %v80
    %v606 = vunpack.c.l.b16 %v81
    %v607 = vunpack.c.l.b16 %v82
    %v608 = vunpack.c.l.b16 %v83
    %v609 = vunpack.c.l.b16 %v84
    %v610 = vunpack.c.l.b16 %v85
    %v611 = vunpack.c.l.b16 %v86
    %v612 = vunpack.c.l.b16 %v87
    %v613 = vunpack.c.l.b16 %v88
    %v614 = vunpack.c.l.b16 %v89
    %v615 = vunpack.c.l.b16 %v90
    %v616 = vunpack.c.l.b16 %v91
    %v617 = vunpack.c.l.b16 %v92
    %v618 = vunpack.c.l.b16 %v93
    %v619 = vunpack.c.l.b16 %v94
    %v620 = vunpack.c.l.b16 %v95
    %v621 = vunpack.c.l.b16 %v96
    %v622 = vunpack.c.l.b16 %v97
    %v623 = vunpack.c.l.b16 %v98
    %v624 = vunpack.c.l.b16 %v99
    %v625 = vunpack.c.l.b16 %v100
    %v626 = vunpack.c.l.b16 %v101
    %v627 = vunpack.c.l.b16 %v102
    %v628 = vunpack.c.l.b16 %v103
    %v629 = vunpack.c.l.b16 %v104
    %v630 = vunpack.c.l.b16 %v105
    %v631 = vunpack.c.l.b16 %v106
    %v632 = vunpack.c.l.b16 %v107
    %v633 = vunpack.c.l.b16 %v108
    %v634 = vunpack.c.l.b16 %v109
    %v635 = vunpack.c.l.b16 %v110
    %v636 = vunpack.c.l.b16 %v111
    %v637 = vunpack.c.l.b16 %v112
    %v638 = vunpack.c.l.b16 %v113
    %v639 = vunpack.c.l.b16 %v114
    %v640 = vunpack.c.l.b16 %v115
    %v641 = vunpack.c.l.b16 %v116
    %v642 = vunpack.c.l.b16 %v117
    %v643 = vunpack.c.l.b16 %v118
    %v644 = vunpack.c.l.b16 %v119
    %v645 = vunpack.c.l.b16 %v120
    %v646 = vunpack.c.l.b16 %v121
    %v647 = vunpack.c.l.b16 %v122
    %v648 = vunpack.c.l.b16 %v123
    %v649 = vunpack.c.l.b16 %v124
    %v650 = vunpack.c.l.b16 %v125
    %v651 = vunpack.c.l.b16 %v126
    %v652 = vunpack.c.l.b16 %v127
    %v653 = vunpack.c.l.b16 %v128
    %v654 = vunpack.c.l.b16 %v129
    %v655 = vunpack.c.l.b16 %v130
    %v656 = vunpack.c.l.b16 %v131
    %v657 = vunpack.c.l.b16 %v132
    %v658 = vunpack.c.l.b16 %v133
    %v659 = vunpack.c.l.b16 %v134
    %v660 = vunpack.c.l.b16 %v135
    %v661 = vunpack.c.l.b16 %v136
    %v662 = vunpack.c.l.b16 %v137
    %v663 = vunpack.c.l.b16 %v138
    %v664 = vunpack.c.l.b16 %v139
    %v665 = vunpack.c.l.b16 %v140
    %v666 = vunpack.c.l.b16 %v141
    %v667 = vunpack.c.l.b16 %v142
    %v668 = vunpack.c.l.b16 %v143
    %v669 = vunpack.c.l.b16 %v144
    %v670 = vunpack.c.l.b16 %v145
    %v671 = vunpack.c.l.b16 %v146
    %v672 = vunpack.c.l.b16 %v147
    %v673 = vunpack.c.l.b16 %v148
    %v674 = vunpack.c.l.b16 %v149
    %v675 = vunpack.c.l.b16 %v150
    %v676 = vunpack.c.l.b16 %v151
    %v677 = vunpack.c.l.b16 %v152
    %v678 = vunpack.c.l.b16 %v153
    %v679 = vunpack.c.l.b16 %v154
    %v680 = vunpack.c.l.b16 %v155
    %v681 = vunpack.c.l.b16 %v156
    %v682 = vunpack.c.l.b16 %v157
    %v683 = vunpack.c.l.b16 %v158
    %v684 = vunpack.c.l.b16 %v159
    %v685 = vunpack.c.l.b16 %v160
    %v686 = vunpack.c.l.b16 %v161
    %v687 = vunpack.c.l.b16 %v162
    %v688 = vunpack.c.l.b16 %v163
    %v689 = vunpack.c.l.b16 %v164
    %v690 = vunpack.c.l.b16 %v165
    %v691 = vunpack.c.l.b16 %v166
    %v692 = vunpack.c.l.b16 %v167
    %v693 = vunpack.c.l.b16 %v168
    %v694 = vunpack.c.l.b16 %v169
    %v695 = vunpack.c.l.b16 %v170
    %v696 = vunpack.c.l.b16 %v171
    %v697 = vunpack.c.l.b16 %v172
    %v698 = vunpack.c.l.b16 %v173
    %v699 = vunpack.c.l.b16 %v174
    %v700 = vunpack.c.l.b16 %v175
    %v701 = vunpack.c.l.b16 %v176
    %v702 = vunpack.c.l.b16 %v177
    %v703 = vunpack.c.l.b16 %v178
    %v704 = vunpack.c.l.b16 %v179
    %v705 = vunpack.c.l.b16 %v180
    %v706 = vunpack.c.l.b16 %v181
    %v707 = vunpack.c.l.b16 %v182
    %v708 = vunpack.c.l.b16 %v183
    %v709 = vunpack.c.l.b16 %v184
    %v710 = vunpack.c.l.b16 %v185
    %v711 = vunpack.c.l.b16 %v186
    %v712 = vunpack.c.l.b16 %v187
    %v713 = vunpack.c.l.b16 %v188
    %v714 = vunpack.c.l.b16 %v189
    %v715 = vunpack.c.l.b16 %v190
    %v716 = vunpack.c.l.b16 %v191
    %v717 = vunpack.c.l.b16 %v192
    %v718 = vunpack.c.l.b16 %v193
    %v719 = vunpack.c.l.b16 %v194
    %v720 = vunpack.c.l.b16 %v195
    %v721 = vunpack.c.l.b16 %v196
    %v722 = vunpack.c.l.b16 %v197
    %v723 = vunpack.c.l.b16 %v198
    %v724 = vunpack.c.l.b16 %v199
    %v725 = vunpack.c.l.b16 %v200
    %v726 = vunpack.c.l.b16 %v201
    %v727 = vunpack.c.l.b16 %v202
    %v728 = vunpack.c.l.b16 %v203
    %v729 = vunpack.c.l.b16 %v204
    %v730 = vunpack.c.l.b16 %v205
    %v731 = vunpack.c.l.b16 %v206
    %v732 = vunpack.c.l.b16 %v207
    %v733 = vunpack.c.l.b16 %v208
    %v734 = vunpack.c.l.b16 %v209
    %v735 = vunpack.c.l.b16 %v210
    %v736 = vunpack.c.l.b16 %v211
    %v737 = vunpack.c.l.b16 %v212
    %v738 = vunpack.c.l.b16 %v213
    %v739 = vunpack.c.l.b16 %v214
    %v740 = vunpack.c.l.b16 %v215
    %v741 = vunpack.c.l.b16 %v216
    %v742 = vunpack.c.l.b16 %v217
    %v743 = vunpack.c.l.b16 %v218
    %v744 = vunpack.c.l.b16 %v219
    %v745 = vunpack.c.l.b16 %v220
    %v746 = vunpack.c.l.b16 %v221
    %v747 = vunpack.c.l.b16 %v222
    %v748 = vunpack.c.l.b16 %v223
    %v749 = vunpack.c.l.b16 %v224
    %v750 = vunpack.c.l.b16 %v225
    %v751 = vunpack.c.l.b16 %v226
    %v752 = vunpack.c.l.b16 %v227
    %v753 = vunpack.c.l.b16 %v228
    %v754 = vunpack.c.l.b16 %v229
    %v755 = vunpack.c.l.b16 %v230
    %v756 = vunpack.c.l.b16 %v231
    %v757 = vunpack.c.l.b16 %v232
    %v758 = vunpack.c.l.b16 %v233
    %v759 = vunpack.c.l.b16 %v234
    %v760 = vunpack.c.l.b16 %v235
    %v761 = vunpack.c.l.b16 %v236
    %v762 = vunpack.c.l.b16 %v237
    %v763 = vunpack.c.l.b16 %v238
    %v764 = vunpack.c.l.b16 %v239
    %v765 = vunpack.c.l.b16 %v240
    %v766 = vunpack.c.l.b16 %v241
    %v767 = vunpack.c.l.b16 %v242
    %v768 = vunpack.c.l.b16 %v243
    %v769 = vunpack.c.l.b16 %v244
    %v770 = vunpack.c.l.b16 %v245
    %v771 = vunpack.c.l.b16 %v246
    %v772 = vunpack.c.l.b16 %v247
    %v773 = vunpack.c.l.b16 %v248
    %v774 = vunpack.c.l.b16 %v249
    %v775 = vunpack.c.l.b16 %v250
    %v776 = vunpack.c.l.b16 %v251
    %v777 = vunpack.c.l.b16 %v252
    %v778 = vunpack.c.l.b16 %v253
    %v779 = vunpack.c.l.b16 %v254
    %v780 = vunpack.c.l.b16 %v255
    %v781 = vunpack.c.l.b16 %v256
    %v782 = vunpack.c.l.b16 %v257
    %v783 = vunpack.c.l.b16 %v258
    %v784 = vunpack.c.l.b16 %v259
    %v785 = vunpack.c.l.b16 %v260
    %v786 = vunpack.c.l.b16 %v261
    %v787 = vunpack.c.l.b16 %v262
    %v788 = vunpack.c.l.b16 %v263
    %v789 = vunpack.c.l.b16 %v264
    %v790 = vunpack.c.l.b16 %v265
    %v791 = vunpack.c.l.b16 %v266
    %v792 = vunpack.c.l.b16 %v267
    %v793 = vunpack.c.l.b16 %v268
    %v794 = vunpack.c.l.b16 %v269
    %v795 = vunpack.c.l.b16 %v270
    %v796 = vunpack.c.l.b16 %v271
    %v797 = vpack.c.b16 %v542, %v541
    %v798 = vpack.c.b16 %v544, %v543
    %v799 = vpack.c.b16 %v546, %v545
    %v800 = vpack.c.b16 %v548, %v547
    %v801 = vpack.c.b16 %v550, %v549
    %v802 = vpack.c.b16 %v552, %v551
    %v803 = vpack.c.b16 %v554, %v553
    %v804 = vpack.c.b16 %v556, %v555
    %v805 = vpack.c.b16 %v558, %v557
    %v806 = vpack.c.b16 %v560, %v559
    %v807 = vpack.c.b16 %v562, %v561
    %v808 = vpack.c.b16 %v564, %v563
    %v809 = vpack.c.b16 %v566, %v565
    %v810 = vpack.c.b16 %v568, %v567
    %v811 = vpack.c.b16 %v570, %v569
    %v812 = vpack.c.b16 %v572, %v571
    %v813 = vpack.c.b16 %v574, %v573
    %v814 = vpack.c.b16 %v576, %v575
    %v815 = vpack.c.b16 %v578, %v577
    %v816 = vpack.c.b16 %v580, %v579
    %v817 = vpack.c.b16 %v582, %v581
    %v818 = vpack.c.b16 %v584, %v583
    %v819 = vpack.c.b16 %v586, %v585
    %v820 = vpack.c.b16 %v588, %v587
    %v821 = vpack.c.b16 %v590, %v589
    %v822 = vpack.c.b16 %v592, %v591
    %v823 = vpack.c.b16 %v594, %v593
    %v824 = vpack.c.b16 %v596, %v595
    %v825 = vpack.c.b16 %v598, %v597
    %v826 = vpack.c.b16 %v600, %v599
    %v827 = vpack.c.b16 %v602, %v601
    %v828 = vpack.c.b16 %v604, %v603
    %v829 = vpack.c.b16 %v606, %v605
    %v830 = vpack.c.b16 %v608, %v607
    %v831 = vpack.c.b16 %v610, %v609
    %v832 = vpack.c.b16 %v612, %v611
    %v833 = vpack.c.b16 %v614, %v613
    %v834 = vpack.c.b16 %v616, %v615
    %v835 = vpack.c.b16 %v618, %v617
    %v836 = vpack.c.b16 %v620, %v619
    %v837 = vpack.c.b16 %v622, %v621
    %v838 = vpack.c.b16 %v624, %v623
    %v839 = vpack.c.b16 %v626, %v625
    %v840 = vpack.c.b16 %v628, %v627
    %v841 = vpack.c.b16 %v630, %v629
    %v842 = vpack.c.b16 %v632, %v631
    %v843 = vpack.c.b16 %v634, %v633
    %v844 = vpack.c.b16 %v636, %v635
    %v845 = vpack.c.b16 %v638, %v637
    %v846 = vpack.c.b16 %v640, %v639
    %v847 = vpack.c.b16 %v642, %v641
    %v848 = vpack.c.b16 %v644, %v643
    %v849 = vpack.c.b16 %v646, %v645
    %v850 = vpack.c.b16 %v648, %v647
    %v851 = vpack.c.b16 %v650, %v649
    %v852 = vpack.c.b16 %v652, %v651
    %v853 = vpack.c.b16 %v654, %v653
    %v854 = vpack.c.b16 %v656, %v655
    %v855 = vpack.c.b16 %v658, %v657
    %v856 = vpack.c.b16 %v660, %v659
    %v857 = vpack.c.b16 %v662, %v661
    %v858 = vpack.c.b16 %v664, %v663
    %v859 = vpack.c.b16 %v666, %v665
    %v860 = vpack.c.b16 %v668, %v667
    %v861 = vpack.c.b16 %v670, %v669
    %v862 = vpack.c.b16 %v672, %v671
    %v863 = vpack.c.b16 %v674, %v673
    %v864 = vpack.c.b16 %v676, %v675
    %v865 = vpack.c.b16 %v678, %v677
    %v866 = vpack.c.b16 %v680, %v679
    %v867 = vpack.c.b16 %v682, %v681
    %v868 = vpack.c.b16 %v684, %v683
    %v869 = vpack.c.b16 %v686, %v685
    %v870 = vpack.c.b16 %v688, %v687
    %v871 = vpack.c.b16 %v690, %v689
    %v872 = vpack.c.b16 %v692, %v691
    %v873 = vpack.c.b16 %v694, %v693
    %v874 = vpack.c.b16 %v696, %v695
    %v875 = vpack.c.b16 %v698, %v697
    %v876 = vpack.c.b16 %v700, %v699
    %v877 = vpack.c.b16 %v702, %v701
    %v878 = vpack.c.b16 %v704, %v703
    %v879 = vpack.c.b16 %v706, %v705
    %v880 = vpack.c.b16 %v708, %v707
    %v881 = vpack.c.b16 %v710, %v709
    %v882 = vpack.c.b16 %v712, %v711
    %v883 = vpack.c.b16 %v714, %v713
    %v884 = vpack.c.b16 %v716, %v715
    %v885 = vpack.c.b16 %v718, %v717
    %v886 = vpack.c.b16 %v720, %v719
    %v887 = vpack.c.b16 %v722, %v721
    %v888 = vpack.c.b16 %v724, %v723
    %v889 = vpack.c.b16 %v726, %v725
    %v890 = vpack.c.b16 %v728, %v727
    %v891 = vpack.c.b16 %v730, %v729
    %v892 = vpack.c.b16 %v732, %v731
    %v893 = vpack.c.b16 %v734, %v733
    %v894 = vpack.c.b16 %v736, %v735
    %v895 = vpack.c.b16 %v738, %v737
    %v896 = vpack.c.b16 %v740, %v739
    %v897 = vpack.c.b16 %v742, %v741
    %v898 = vpack.c.b16 %v744, %v743
    %v899 = vpack.c.b16 %v746, %v745
    %v900 = vpack.c.b16 %v748, %v747
    %v901 = vpack.c.b16 %v750, %v749
    %v902 = vpack.c.b16 %v752, %v751
    %v903 = vpack.c.b16 %v754, %v753
    %v904 = vpack.c.b16 %v756, %v755
    %v905 = vpack.c.b16 %v758, %v757
    %v906 = vpack.c.b16 %v760, %v759
    %v907 = vpack.c.b16 %v762, %v761
    %v908 = vpack.c.b16 %v764, %v763
    %v909 = vpack.c.b16 %v766, %v765
    %v910 = vpack.c.b16 %v768, %v767
    %v911 = vpack.c.b16 %v770, %v769
    %v912 = vpack.c.b16 %v772, %v771
    %v913 = vpack.c.b16 %v774, %v773
    %v914 = vpack.c.b16 %v776, %v775
    %v915 = vpack.c.b16 %v778, %v777
    %v916 = vpack.c.b16 %v780, %v779
    %v917 = vpack.c.b16 %v782, %v781
    %v918 = vpack.c.b16 %v784, %v783
    %v919 = vpack.c.b16 %v786, %v785
    %v920 = vpack.c.b16 %v788, %v787
    %v921 = vpack.c.b16 %v790, %v789
    %v922 = vpack.c.b16 %v792, %v791
    %v923 = vpack.c.b16 %v794, %v793
    %v924 = vpack.c.b16 %v796, %v795
    %v931 = vunpack.c.l.b16 %v272
    %v932 = vunpack.c.l.b16 %v273
    %v933 = vunpack.c.l.b16 %v274
    %v934 = vunpack.c.l.b16 %v275
    %v935 = vunpack.c.l.b16 %v276
    %v936 = vunpack.c.l.b16 %v277
    %v937 = vpack.c.b16 %v932, %v931
    %v938 = vpack.c.b16 %v934, %v933
    %v939 = vpack.c.b16 %v936, %v935
    %vm943 = vcmask 392192
    %v945 = vsel %vm943, %v797, 0
    %v948 = vsel %vm943, %v798, 0
    %v951 = vsel %vm943, %v799, 0
    %v954 = vsel %vm943, %v800, 0
    %v957 = vsel %vm943, %v801, 0
    %v960 = vsel %vm943, %v802, 0
    %v963 = vsel %vm943, %v803, 0
    %v966 = vsel %vm943, %v804, 0
    %v969 = vsel %vm943, %v805, 0
    %v972 = vsel %vm943, %v806, 0
    %v975 = vsel %vm943, %v807, 0
    %v978 = vsel %vm943, %v808, 0
    %v981 = vsel %vm943, %v809, 0
    %v984 = vsel %vm943, %v810, 0
    %v987 = vsel %vm943, %v811, 0
    %v990 = vsel %vm943, %v812, 0
    %v993 = vsel %vm943, %v813, 0
    %v996 = vsel %vm943, %v814, 0
    %v999 = vsel %vm943, %v815, 0
    %v1002 = vsel %vm943, %v816, 0
    %v1005 = vsel %vm943, %v817, 0
    %v1008 = vsel %vm943, %v818, 0
    %v1011 = vsel %vm943, %v819, 0
    %v1014 = vsel %vm943, %v820, 0
    %v1017 = vsel %vm943, %v821, 0
    %v1020 = vsel %vm943, %v822, 0
    %v1023 = vsel %vm943, %v823, 0
    %v1026 = vsel %vm943, %v824, 0
    %v1029 = vsel %vm943, %v825, 0
    %v1032 = vsel %vm943, %v826, 0
    %v1035 = vsel %vm943, %v827, 0
    %v1038 = vsel %vm943, %v828, 0
    %v1041 = vsel %vm943, %v829, 0
    %v1044 = vsel %vm943, %v830, 0
    %v1047 = vsel %vm943, %v831, 0
    %v1050 = vsel %vm943, %v832, 0
    %v1053 = vsel %vm943, %v833, 0
    %v1056 = vsel %vm943, %v834, 0
    %v1059 = vsel %vm943, %v835, 0
    %v1062 = vsel %vm943, %v836, 0
    %v1065 = vsel %vm943, %v837, 0
    %v1068 = vsel %vm943, %v838, 0
    %v1071 = vsel %vm943, %v839, 0
    %v1074 = vsel %vm943, %v840, 0
    %v1077 = vsel %vm943, %v841, 0
    %v1080 = vsel %vm943, %v842, 0
    %v1083 = vsel %vm943, %v843, 0
    %v1086 = vsel %vm943, %v844, 0
    %v1089 = vsel %vm943, %v845, 0
    %v1092 = vsel %vm943, %v846, 0
    %v1095 = vsel %vm943, %v847, 0
    %v1098 = vsel %vm943, %v848, 0
    %v1101 = vsel %vm943, %v849, 0
    %v1104 = vsel %vm943, %v850, 0
    %v1107 = vsel %vm943, %v851, 0
    %v1110 = vsel %vm943, %v852, 0
    %v1113 = vsel %vm943, %v853, 0
    %v1116 = vsel %vm943, %v854, 0
    %v1119 = vsel %vm943, %v855, 0
    %v1122 = vsel %vm943, %v856, 0
    %v1125 = vsel %vm943, %v857, 0
    %v1128 = vsel %vm943, %v858, 0
    %v1131 = vsel %vm943, %v859, 0
    %v1134 = vsel %vm943, %v860, 0
    %v1137 = vsel %vm943, %v861, 0
    %v1140 = vsel %vm943, %v862, 0
    %v1143 = vsel %vm943, %v863, 0
    %v1146 = vsel %vm943, %v864, 0
    %v1149 = vsel %vm943, %v865, 0
    %v1152 = vsel %vm943, %v866, 0
    %v1155 = vsel %vm943, %v867, 0
    %v1158 = vsel %vm943, %v868, 0
    %v1161 = vsel %vm943, %v869, 0
    %v1164 = vsel %vm943, %v870, 0
    %v1167 = vsel %vm943, %v871, 0
    %v1170 = vsel %vm943, %v872, 0
    %v1173 = vsel %vm943, %v873, 0
    %v1176 = vsel %vm943, %v874, 0
    %v1179 = vsel %vm943, %v875, 0
    %v1182 = vsel %vm943, %v876, 0
    %v1185 = vsel %vm943, %v877, 0
    %v1188 = vsel %vm943, %v878, 0
    %v1191 = vsel %vm943, %v879, 0
    %v1194 = vsel %vm943, %v880, 0
    %v1197 = vsel %vm943, %v881, 0
    %v1200 = vsel %vm943, %v882, 0
    %v1203 = vsel %vm943, %v883, 0
    %v1206 = vsel %vm943, %v884, 0
    %v1209 = vsel %vm943, %v885, 0
    %v1212 = vsel %vm943, %v886, 0
    %v1215 = vsel %vm943, %v887, 0
    %v1218 = vsel %vm943, %v888, 0
    %v1221 = vsel %vm943, %v889, 0
    %v1224 = vsel %vm943, %v890, 0
    %v1227 = vsel %vm943, %v891, 0
    %v1230 = vsel %vm943, %v892, 0
    %v1233 = vsel %vm943, %v893, 0
    %v1236 = vsel %vm943, %v894, 0
    %v1239 = vsel %vm943, %v895, 0
    %v1242 = vsel %vm943, %v896, 0
    %v1245 = vsel %vm943, %v897, 0
    %v1248 = vsel %vm943, %v898, 0
    %v1251 = vsel %vm943, %v899, 0
    %v1254 = vsel %vm943, %v900, 0
    %v1257 = vsel %vm943, %v901, 0
    %v1260 = vsel %vm943, %v902, 0
    %v1263 = vsel %vm943, %v903, 0
    %v1266 = vsel %vm943, %v904, 0
    %v1269 = vsel %vm943, %v905, 0
    %v1272 = vsel %vm943, %v906, 0
    %v1275 = vsel %vm943, %v907, 0
    %v1278 = vsel %vm943, %v908, 0
    %v1281 = vsel %vm943, %v909, 0
    %v1284 = vsel %vm943, %v910, 0
    %v1287 = vsel %vm943, %v911, 0
    %v1290 = vsel %vm943, %v912, 0
    %v1293 = vsel %vm943, %v913, 0
    %v1296 = vsel %vm943, %v914, 0
    %v1299 = vsel %vm943, %v915, 0
    %v1302 = vsel %vm943, %v916, 0
    %v1305 = vsel %vm943, %v917, 0
    %v1308 = vsel %vm943, %v918, 0
    %v1311 = vsel %vm943, %v919, 0
    %v1314 = vsel %vm943, %v920, 0
    %v1317 = vsel %vm943, %v921, 0
    %v1320 = vsel %vm943, %v922, 0
    %v1323 = vsel %vm943, %v923, 0
    %v1326 = vsel %vm943, %v924, 0
    %1328 = vmatprep.subr.bf16.mxu0 0
    %1329 = vmatpush1.bf16.msra.mxu0 0
    %1330 = vmatprep.subr.bf16.mxu0 0
    %1331 = vmatpush1.bf16.msra.mxu0 0
    %1332 = vmatprep.subr.bf16.mxu0 0
    %1333 = vmatpush1.bf16.msra.mxu0 0
    %1334 = vmatprep.subr.bf16.mxu0 0
    %1335 = vmatpush1.bf16.msra.mxu0 0
    %1336 = vmatprep.subr.bf16.mxu0 0
    %1337 = vmatpush1.bf16.msra.mxu0 0
    %1338 = vmatprep.subr.bf16.mxu0 0
    %1339 = vmatpush1.bf16.msra.mxu0 %v939
    %1340 = vmatprep.subr.bf16.mxu0 0
    %1341 = vmatpush1.bf16.msra.mxu0 %v938
    %1342 = vmatprep.subr.bf16.mxu0 0
    %1343 = vmatpush1.bf16.msra.mxu0 %v937
    %1344 = vmatprep.subr.bf16.mxu0 0
    %1345 = vmatpush2.bf16.msra.mxu0 0
    %1346 = vmatprep.subr.bf16.mxu0 0
    %1347 = vmatpush2.bf16.msra.mxu0 0
    %1348 = vmatprep.subr.bf16.mxu0 0
    %1349 = vmatpush2.bf16.msra.mxu0 0
    %1350 = vmatprep.subr.bf16.mxu0 0
    %1351 = vmatpush2.bf16.msra.mxu0 0
    %1352 = vmatprep.subr.bf16.mxu0 0
    %1353 = vmatpush2.bf16.msra.mxu0 0
    %1354 = vmatprep.subr.bf16.mxu0 0
    %1355 = vmatpush2.bf16.msra.mxu0 0
    %1356 = vmatprep.subr.bf16.mxu0 0
    %1357 = vmatpush2.bf16.msra.mxu0 0
    %1358 = vmatprep.subr.bf16.mxu0 0
    %1359 = vmatpush2.bf16.msra.mxu0 0
    %1360 = vmatprep.mubr.bf16.mxu0 0
    %1361 = vmatmul.mubr.bf16.gmra.mxu0 %v945
    %v1362 = vpop.f32.mrf.mxu0
    %v1363 = vadd.f32 %v283, %v1362
    %v1364 = vpop.f32.mrf.mxu0
    %v1365 = vpop.f32.mrf.mxu0
    %v1366 = vadd.f32 %v283, %v1365
    %v1367 = vpop.f32.mrf.mxu0
    %1368 = vmatprep.mubr.bf16.mxu0 0
    %1369 = vmatmul.mubr.bf16.gmra.mxu0 %v948
    %v1370 = vpop.f32.mrf.mxu0
    %v1371 = vadd.f32 %v283, %v1370
    %v1372 = vpop.f32.mrf.mxu0
    %v1373 = vpop.f32.mrf.mxu0
    %v1374 = vadd.f32 %v283, %v1373
    %v1375 = vpop.f32.mrf.mxu0
    %1376 = vmatprep.mubr.bf16.mxu0 0
    %1377 = vmatmul.mubr.bf16.gmra.mxu0 %v951
    %v1378 = vpop.f32.mrf.mxu0
    %v1379 = vadd.f32 %v283, %v1378
    %v1380 = vpop.f32.mrf.mxu0
    %v1381 = vpop.f32.mrf.mxu0
    %v1382 = vadd.f32 %v283, %v1381
    %v1383 = vpop.f32.mrf.mxu0
    %1384 = vmatprep.mubr.bf16.mxu0 0
    %1385 = vmatmul.mubr.bf16.gmra.mxu0 %v954
    %v1386 = vpop.f32.mrf.mxu0
    %v1387 = vadd.f32 %v283, %v1386
    %v1388 = vpop.f32.mrf.mxu0
    %v1389 = vpop.f32.mrf.mxu0
    %v1390 = vadd.f32 %v283, %v1389
    %v1391 = vpop.f32.mrf.mxu0
    %1392 = vmatprep.mubr.bf16.mxu0 0
    %1393 = vmatmul.mubr.bf16.gmra.mxu0 %v957
    %v1394 = vpop.f32.mrf.mxu0
    %v1395 = vadd.f32 %v283, %v1394
    %v1396 = vpop.f32.mrf.mxu0
    %v1397 = vpop.f32.mrf.mxu0
    %v1398 = vadd.f32 %v283, %v1397
    %v1399 = vpop.f32.mrf.mxu0
    %1400 = vmatprep.mubr.bf16.mxu0 0
    %1401 = vmatmul.mubr.bf16.gmra.mxu0 %v960
    %v1402 = vpop.f32.mrf.mxu0
    %v1403 = vadd.f32 %v283, %v1402
    %v1404 = vpop.f32.mrf.mxu0
    %v1405 = vpop.f32.mrf.mxu0
    %v1406 = vadd.f32 %v283, %v1405
    %v1407 = vpop.f32.mrf.mxu0
    %1408 = vmatprep.mubr.bf16.mxu0 0
    %1409 = vmatmul.mubr.bf16.gmra.mxu0 %v963
    %v1410 = vpop.f32.mrf.mxu0
    %v1411 = vadd.f32 %v283, %v1410
    %v1412 = vpop.f32.mrf.mxu0
    %v1413 = vpop.f32.mrf.mxu0
    %v1414 = vadd.f32 %v283, %v1413
    %v1415 = vpop.f32.mrf.mxu0
    %1416 = vmatprep.mubr.bf16.mxu0 0
    %1417 = vmatmul.mubr.bf16.gmra.mxu0 %v966
    %v1418 = vpop.f32.mrf.mxu0
    %v1419 = vadd.f32 %v283, %v1418
    %v1420 = vpop.f32.mrf.mxu0
    %v1421 = vpop.f32.mrf.mxu0
    %v1422 = vadd.f32 %v283, %v1421
    %v1423 = vpop.f32.mrf.mxu0
    %1424 = vmatprep.mubr.bf16.mxu0 0
    %1425 = vmatmul.mubr.bf16.gmra.mxu0 %v969
    %v1426 = vpop.f32.mrf.mxu0
    %v1427 = vadd.f32 %v283, %v1426
    %v1428 = vpop.f32.mrf.mxu0
    %v1429 = vpop.f32.mrf.mxu0
    %v1430 = vadd.f32 %v283, %v1429
    %v1431 = vpop.f32.mrf.mxu0
    %1432 = vmatprep.mubr.bf16.mxu0 0
    %1433 = vmatmul.mubr.bf16.gmra.mxu0 %v972
    %v1434 = vpop.f32.mrf.mxu0
    %v1435 = vadd.f32 %v283, %v1434
    %v1436 = vpop.f32.mrf.mxu0
    %v1437 = vpop.f32.mrf.mxu0
    %v1438 = vadd.f32 %v283, %v1437
    %v1439 = vpop.f32.mrf.mxu0
    %1440 = vmatprep.mubr.bf16.mxu0 0
    %1441 = vmatmul.mubr.bf16.gmra.mxu0 %v975
    %v1442 = vpop.f32.mrf.mxu0
    %v1443 = vadd.f32 %v283, %v1442
    %v1444 = vpop.f32.mrf.mxu0
    %v1445 = vpop.f32.mrf.mxu0
    %v1446 = vadd.f32 %v283, %v1445
    %v1447 = vpop.f32.mrf.mxu0
    %1448 = vmatprep.mubr.bf16.mxu0 0
    %1449 = vmatmul.mubr.bf16.gmra.mxu0 %v978
    %v1450 = vpop.f32.mrf.mxu0
    %v1451 = vadd.f32 %v283, %v1450
    %v1452 = vpop.f32.mrf.mxu0
    %v1453 = vpop.f32.mrf.mxu0
    %v1454 = vadd.f32 %v283, %v1453
    %v1455 = vpop.f32.mrf.mxu0
    %1456 = vmatprep.mubr.bf16.mxu0 0
    %1457 = vmatmul.mubr.bf16.gmra.mxu0 %v981
    %v1458 = vpop.f32.mrf.mxu0
    %v1459 = vadd.f32 %v283, %v1458
    %v1460 = vpop.f32.mrf.mxu0
    %v1461 = vpop.f32.mrf.mxu0
    %v1462 = vadd.f32 %v283, %v1461
    %v1463 = vpop.f32.mrf.mxu0
    %1464 = vmatprep.mubr.bf16.mxu0 0
    %1465 = vmatmul.mubr.bf16.gmra.mxu0 %v984
    %v1466 = vpop.f32.mrf.mxu0
    %v1467 = vadd.f32 %v283, %v1466
    %v1468 = vpop.f32.mrf.mxu0
    %v1469 = vpop.f32.mrf.mxu0
    %v1470 = vadd.f32 %v283, %v1469
    %v1471 = vpop.f32.mrf.mxu0
    %1472 = vmatprep.mubr.bf16.mxu0 0
    %1473 = vmatmul.mubr.bf16.gmra.mxu0 %v987
    %v1474 = vpop.f32.mrf.mxu0
    %v1475 = vadd.f32 %v283, %v1474
    %v1476 = vpop.f32.mrf.mxu0
    %v1477 = vpop.f32.mrf.mxu0
    %v1478 = vadd.f32 %v283, %v1477
    %v1479 = vpop.f32.mrf.mxu0
    %1480 = vmatprep.mubr.bf16.mxu0 0
    %1481 = vmatmul.mubr.bf16.gmra.mxu0 %v990
    %v1482 = vpop.f32.mrf.mxu0
    %v1483 = vadd.f32 %v283, %v1482
    %v1484 = vpop.f32.mrf.mxu0
    %v1485 = vpop.f32.mrf.mxu0
    %v1486 = vadd.f32 %v283, %v1485
    %v1487 = vpop.f32.mrf.mxu0
    %1488 = vmatprep.mubr.bf16.mxu0 0
    %1489 = vmatmul.mubr.bf16.gmra.mxu0 %v993
    %v1490 = vpop.f32.mrf.mxu0
    %v1491 = vadd.f32 %v283, %v1490
    %v1492 = vpop.f32.mrf.mxu0
    %v1493 = vpop.f32.mrf.mxu0
    %v1494 = vadd.f32 %v283, %v1493
    %v1495 = vpop.f32.mrf.mxu0
    %1496 = vmatprep.mubr.bf16.mxu0 0
    %1497 = vmatmul.mubr.bf16.gmra.mxu0 %v996
    %v1498 = vpop.f32.mrf.mxu0
    %v1499 = vadd.f32 %v283, %v1498
    %v1500 = vpop.f32.mrf.mxu0
    %v1501 = vpop.f32.mrf.mxu0
    %v1502 = vadd.f32 %v283, %v1501
    %v1503 = vpop.f32.mrf.mxu0
    %1504 = vmatprep.mubr.bf16.mxu0 0
    %1505 = vmatmul.mubr.bf16.gmra.mxu0 %v999
    %v1506 = vpop.f32.mrf.mxu0
    %v1507 = vadd.f32 %v283, %v1506
    %v1508 = vpop.f32.mrf.mxu0
    %v1509 = vpop.f32.mrf.mxu0
    %v1510 = vadd.f32 %v283, %v1509
    %v1511 = vpop.f32.mrf.mxu0
    %1512 = vmatprep.mubr.bf16.mxu0 0
    %1513 = vmatmul.mubr.bf16.gmra.mxu0 %v1002
    %v1514 = vpop.f32.mrf.mxu0
    %v1515 = vadd.f32 %v283, %v1514
    %v1516 = vpop.f32.mrf.mxu0
    %v1517 = vpop.f32.mrf.mxu0
    %v1518 = vadd.f32 %v283, %v1517
    %v1519 = vpop.f32.mrf.mxu0
    %1520 = vmatprep.mubr.bf16.mxu0 0
    %1521 = vmatmul.mubr.bf16.gmra.mxu0 %v1005
    %v1522 = vpop.f32.mrf.mxu0
    %v1523 = vadd.f32 %v283, %v1522
    %v1524 = vpop.f32.mrf.mxu0
    %v1525 = vpop.f32.mrf.mxu0
    %v1526 = vadd.f32 %v283, %v1525
    %v1527 = vpop.f32.mrf.mxu0
    %1528 = vmatprep.mubr.bf16.mxu0 0
    %1529 = vmatmul.mubr.bf16.gmra.mxu0 %v1008
    %v1530 = vpop.f32.mrf.mxu0
    %v1531 = vadd.f32 %v283, %v1530
    %v1532 = vpop.f32.mrf.mxu0
    %v1533 = vpop.f32.mrf.mxu0
    %v1534 = vadd.f32 %v283, %v1533
    %v1535 = vpop.f32.mrf.mxu0
    %1536 = vmatprep.mubr.bf16.mxu0 0
    %1537 = vmatmul.mubr.bf16.gmra.mxu0 %v1011
    %v1538 = vpop.f32.mrf.mxu0
    %v1539 = vadd.f32 %v283, %v1538
    %v1540 = vpop.f32.mrf.mxu0
    %v1541 = vpop.f32.mrf.mxu0
    %v1542 = vadd.f32 %v283, %v1541
    %v1543 = vpop.f32.mrf.mxu0
    %1544 = vmatprep.mubr.bf16.mxu0 0
    %1545 = vmatmul.mubr.bf16.gmra.mxu0 %v1014
    %v1546 = vpop.f32.mrf.mxu0
    %v1547 = vadd.f32 %v283, %v1546
    %v1548 = vpop.f32.mrf.mxu0
    %v1549 = vpop.f32.mrf.mxu0
    %v1550 = vadd.f32 %v283, %v1549
    %v1551 = vpop.f32.mrf.mxu0
    %1552 = vmatprep.mubr.bf16.mxu0 0
    %1553 = vmatmul.mubr.bf16.gmra.mxu0 %v1017
    %v1554 = vpop.f32.mrf.mxu0
    %v1555 = vadd.f32 %v283, %v1554
    %v1556 = vpop.f32.mrf.mxu0
    %v1557 = vpop.f32.mrf.mxu0
    %v1558 = vadd.f32 %v283, %v1557
    %v1559 = vpop.f32.mrf.mxu0
    %1560 = vmatprep.mubr.bf16.mxu0 0
    %1561 = vmatmul.mubr.bf16.gmra.mxu0 %v1020
    %v1562 = vpop.f32.mrf.mxu0
    %v1563 = vadd.f32 %v283, %v1562
    %v1564 = vpop.f32.mrf.mxu0
    %v1565 = vpop.f32.mrf.mxu0
    %v1566 = vadd.f32 %v283, %v1565
    %v1567 = vpop.f32.mrf.mxu0
    %1568 = vmatprep.mubr.bf16.mxu0 0
    %1569 = vmatmul.mubr.bf16.gmra.mxu0 %v1023
    %v1570 = vpop.f32.mrf.mxu0
    %v1571 = vadd.f32 %v283, %v1570
    %v1572 = vpop.f32.mrf.mxu0
    %v1573 = vpop.f32.mrf.mxu0
    %v1574 = vadd.f32 %v283, %v1573
    %v1575 = vpop.f32.mrf.mxu0
    %1576 = vmatprep.mubr.bf16.mxu0 0
    %1577 = vmatmul.mubr.bf16.gmra.mxu0 %v1026
    %v1578 = vpop.f32.mrf.mxu0
    %v1579 = vadd.f32 %v283, %v1578
    %v1580 = vpop.f32.mrf.mxu0
    %v1581 = vpop.f32.mrf.mxu0
    %v1582 = vadd.f32 %v283, %v1581
    %v1583 = vpop.f32.mrf.mxu0
    %1584 = vmatprep.mubr.bf16.mxu0 0
    %1585 = vmatmul.mubr.bf16.gmra.mxu0 %v1029
    %v1586 = vpop.f32.mrf.mxu0
    %v1587 = vadd.f32 %v283, %v1586
    %v1588 = vpop.f32.mrf.mxu0
    %v1589 = vpop.f32.mrf.mxu0
    %v1590 = vadd.f32 %v283, %v1589
    %v1591 = vpop.f32.mrf.mxu0
    %1592 = vmatprep.mubr.bf16.mxu0 0
    %1593 = vmatmul.mubr.bf16.gmra.mxu0 %v1032
    %v1594 = vpop.f32.mrf.mxu0
    %v1595 = vadd.f32 %v283, %v1594
    %v1596 = vpop.f32.mrf.mxu0
    %v1597 = vpop.f32.mrf.mxu0
    %v1598 = vadd.f32 %v283, %v1597
    %v1599 = vpop.f32.mrf.mxu0
    %1600 = vmatprep.mubr.bf16.mxu0 0
    %1601 = vmatmul.mubr.bf16.gmra.mxu0 %v1035
    %v1602 = vpop.f32.mrf.mxu0
    %v1603 = vadd.f32 %v283, %v1602
    %v1604 = vpop.f32.mrf.mxu0
    %v1605 = vpop.f32.mrf.mxu0
    %v1606 = vadd.f32 %v283, %v1605
    %v1607 = vpop.f32.mrf.mxu0
    %1608 = vmatprep.mubr.bf16.mxu0 0
    %1609 = vmatmul.mubr.bf16.gmra.mxu0 %v1038
    %v1610 = vpop.f32.mrf.mxu0
    %v1611 = vadd.f32 %v283, %v1610
    %v1612 = vpop.f32.mrf.mxu0
    %v1613 = vpop.f32.mrf.mxu0
    %v1614 = vadd.f32 %v283, %v1613
    %v1615 = vpop.f32.mrf.mxu0
    %1616 = vmatprep.mubr.bf16.mxu0 0
    %1617 = vmatmul.mubr.bf16.gmra.mxu0 %v1041
    %v1618 = vpop.f32.mrf.mxu0
    %v1619 = vadd.f32 %v283, %v1618
    %v1620 = vpop.f32.mrf.mxu0
    %v1621 = vpop.f32.mrf.mxu0
    %v1622 = vadd.f32 %v283, %v1621
    %v1623 = vpop.f32.mrf.mxu0
    %1624 = vmatprep.mubr.bf16.mxu0 0
    %1625 = vmatmul.mubr.bf16.gmra.mxu0 %v1044
    %v1626 = vpop.f32.mrf.mxu0
    %v1627 = vadd.f32 %v283, %v1626
    %v1628 = vpop.f32.mrf.mxu0
    %v1629 = vpop.f32.mrf.mxu0
    %v1630 = vadd.f32 %v283, %v1629
    %v1631 = vpop.f32.mrf.mxu0
    %1632 = vmatprep.mubr.bf16.mxu0 0
    %1633 = vmatmul.mubr.bf16.gmra.mxu0 %v1047
    %v1634 = vpop.f32.mrf.mxu0
    %v1635 = vadd.f32 %v283, %v1634
    %v1636 = vpop.f32.mrf.mxu0
    %v1637 = vpop.f32.mrf.mxu0
    %v1638 = vadd.f32 %v283, %v1637
    %v1639 = vpop.f32.mrf.mxu0
    %1640 = vmatprep.mubr.bf16.mxu0 0
    %1641 = vmatmul.mubr.bf16.gmra.mxu0 %v1050
    %v1642 = vpop.f32.mrf.mxu0
    %v1643 = vadd.f32 %v283, %v1642
    %v1644 = vpop.f32.mrf.mxu0
    %v1645 = vpop.f32.mrf.mxu0
    %v1646 = vadd.f32 %v283, %v1645
    %v1647 = vpop.f32.mrf.mxu0
    %1648 = vmatprep.mubr.bf16.mxu0 0
    %1649 = vmatmul.mubr.bf16.gmra.mxu0 %v1053
    %v1650 = vpop.f32.mrf.mxu0
    %v1651 = vadd.f32 %v283, %v1650
    %v1652 = vpop.f32.mrf.mxu0
    %v1653 = vpop.f32.mrf.mxu0
    %v1654 = vadd.f32 %v283, %v1653
    %v1655 = vpop.f32.mrf.mxu0
    %1656 = vmatprep.mubr.bf16.mxu0 0
    %1657 = vmatmul.mubr.bf16.gmra.mxu0 %v1056
    %v1658 = vpop.f32.mrf.mxu0
    %v1659 = vadd.f32 %v283, %v1658
    %v1660 = vpop.f32.mrf.mxu0
    %v1661 = vpop.f32.mrf.mxu0
    %v1662 = vadd.f32 %v283, %v1661
    %v1663 = vpop.f32.mrf.mxu0
    %1664 = vmatprep.mubr.bf16.mxu0 0
    %1665 = vmatmul.mubr.bf16.gmra.mxu0 %v1059
    %v1666 = vpop.f32.mrf.mxu0
    %v1667 = vadd.f32 %v283, %v1666
    %v1668 = vpop.f32.mrf.mxu0
    %v1669 = vpop.f32.mrf.mxu0
    %v1670 = vadd.f32 %v283, %v1669
    %v1671 = vpop.f32.mrf.mxu0
    %1672 = vmatprep.mubr.bf16.mxu0 0
    %1673 = vmatmul.mubr.bf16.gmra.mxu0 %v1062
    %v1674 = vpop.f32.mrf.mxu0
    %v1675 = vadd.f32 %v283, %v1674
    %v1676 = vpop.f32.mrf.mxu0
    %v1677 = vpop.f32.mrf.mxu0
    %v1678 = vadd.f32 %v283, %v1677
    %v1679 = vpop.f32.mrf.mxu0
    %1680 = vmatprep.mubr.bf16.mxu0 0
    %1681 = vmatmul.mubr.bf16.gmra.mxu0 %v1065
    %v1682 = vpop.f32.mrf.mxu0
    %v1683 = vadd.f32 %v283, %v1682
    %v1684 = vpop.f32.mrf.mxu0
    %v1685 = vpop.f32.mrf.mxu0
    %v1686 = vadd.f32 %v283, %v1685
    %v1687 = vpop.f32.mrf.mxu0
    %1688 = vmatprep.mubr.bf16.mxu0 0
    %1689 = vmatmul.mubr.bf16.gmra.mxu0 %v1068
    %v1690 = vpop.f32.mrf.mxu0
    %v1691 = vadd.f32 %v283, %v1690
    %v1692 = vpop.f32.mrf.mxu0
    %v1693 = vpop.f32.mrf.mxu0
    %v1694 = vadd.f32 %v283, %v1693
    %v1695 = vpop.f32.mrf.mxu0
    %1696 = vmatprep.mubr.bf16.mxu0 0
    %1697 = vmatmul.mubr.bf16.gmra.mxu0 %v1071
    %v1698 = vpop.f32.mrf.mxu0
    %v1699 = vadd.f32 %v283, %v1698
    %v1700 = vpop.f32.mrf.mxu0
    %v1701 = vpop.f32.mrf.mxu0
    %v1702 = vadd.f32 %v283, %v1701
    %v1703 = vpop.f32.mrf.mxu0
    %1704 = vmatprep.mubr.bf16.mxu0 0
    %1705 = vmatmul.mubr.bf16.gmra.mxu0 %v1074
    %v1706 = vpop.f32.mrf.mxu0
    %v1707 = vadd.f32 %v283, %v1706
    %v1708 = vpop.f32.mrf.mxu0
    %v1709 = vpop.f32.mrf.mxu0
    %v1710 = vadd.f32 %v283, %v1709
    %v1711 = vpop.f32.mrf.mxu0
    %1712 = vmatprep.mubr.bf16.mxu0 0
    %1713 = vmatmul.mubr.bf16.gmra.mxu0 %v1077
    %v1714 = vpop.f32.mrf.mxu0
    %v1715 = vadd.f32 %v283, %v1714
    %v1716 = vpop.f32.mrf.mxu0
    %v1717 = vpop.f32.mrf.mxu0
    %v1718 = vadd.f32 %v283, %v1717
    %v1719 = vpop.f32.mrf.mxu0
    %1720 = vmatprep.mubr.bf16.mxu0 0
    %1721 = vmatmul.mubr.bf16.gmra.mxu0 %v1080
    %v1722 = vpop.f32.mrf.mxu0
    %v1723 = vadd.f32 %v283, %v1722
    %v1724 = vpop.f32.mrf.mxu0
    %v1725 = vpop.f32.mrf.mxu0
    %v1726 = vadd.f32 %v283, %v1725
    %v1727 = vpop.f32.mrf.mxu0
    %1728 = vmatprep.mubr.bf16.mxu0 0
    %1729 = vmatmul.mubr.bf16.gmra.mxu0 %v1083
    %v1730 = vpop.f32.mrf.mxu0
    %v1731 = vadd.f32 %v283, %v1730
    %v1732 = vpop.f32.mrf.mxu0
    %v1733 = vpop.f32.mrf.mxu0
    %v1734 = vadd.f32 %v283, %v1733
    %v1735 = vpop.f32.mrf.mxu0
    %1736 = vmatprep.mubr.bf16.mxu0 0
    %1737 = vmatmul.mubr.bf16.gmra.mxu0 %v1086
    %v1738 = vpop.f32.mrf.mxu0
    %v1739 = vadd.f32 %v283, %v1738
    %v1740 = vpop.f32.mrf.mxu0
    %v1741 = vpop.f32.mrf.mxu0
    %v1742 = vadd.f32 %v283, %v1741
    %v1743 = vpop.f32.mrf.mxu0
    %1744 = vmatprep.mubr.bf16.mxu0 0
    %1745 = vmatmul.mubr.bf16.gmra.mxu0 %v1089
    %v1746 = vpop.f32.mrf.mxu0
    %v1747 = vadd.f32 %v283, %v1746
    %v1748 = vpop.f32.mrf.mxu0
    %v1749 = vpop.f32.mrf.mxu0
    %v1750 = vadd.f32 %v283, %v1749
    %v1751 = vpop.f32.mrf.mxu0
    %1752 = vmatprep.mubr.bf16.mxu0 0
    %1753 = vmatmul.mubr.bf16.gmra.mxu0 %v1092
    %v1754 = vpop.f32.mrf.mxu0
    %v1755 = vadd.f32 %v283, %v1754
    %v1756 = vpop.f32.mrf.mxu0
    %v1757 = vpop.f32.mrf.mxu0
    %v1758 = vadd.f32 %v283, %v1757
    %v1759 = vpop.f32.mrf.mxu0
    %1760 = vmatprep.mubr.bf16.mxu0 0
    %1761 = vmatmul.mubr.bf16.gmra.mxu0 %v1095
    %v1762 = vpop.f32.mrf.mxu0
    %v1763 = vadd.f32 %v283, %v1762
    %v1764 = vpop.f32.mrf.mxu0
    %v1765 = vpop.f32.mrf.mxu0
    %v1766 = vadd.f32 %v283, %v1765
    %v1767 = vpop.f32.mrf.mxu0
    %1768 = vmatprep.mubr.bf16.mxu0 0
    %1769 = vmatmul.mubr.bf16.gmra.mxu0 %v1098
    %v1770 = vpop.f32.mrf.mxu0
    %v1771 = vadd.f32 %v283, %v1770
    %v1772 = vpop.f32.mrf.mxu0
    %v1773 = vpop.f32.mrf.mxu0
    %v1774 = vadd.f32 %v283, %v1773
    %v1775 = vpop.f32.mrf.mxu0
    %1776 = vmatprep.mubr.bf16.mxu0 0
    %1777 = vmatmul.mubr.bf16.gmra.mxu0 %v1101
    %v1778 = vpop.f32.mrf.mxu0
    %v1779 = vadd.f32 %v283, %v1778
    %v1780 = vpop.f32.mrf.mxu0
    %v1781 = vpop.f32.mrf.mxu0
    %v1782 = vadd.f32 %v283, %v1781
    %v1783 = vpop.f32.mrf.mxu0
    %1784 = vmatprep.mubr.bf16.mxu0 0
    %1785 = vmatmul.mubr.bf16.gmra.mxu0 %v1104
    %v1786 = vpop.f32.mrf.mxu0
    %v1787 = vadd.f32 %v283, %v1786
    %v1788 = vpop.f32.mrf.mxu0
    %v1789 = vpop.f32.mrf.mxu0
    %v1790 = vadd.f32 %v283, %v1789
    %v1791 = vpop.f32.mrf.mxu0
    %1792 = vmatprep.mubr.bf16.mxu0 0
    %1793 = vmatmul.mubr.bf16.gmra.mxu0 %v1107
    %v1794 = vpop.f32.mrf.mxu0
    %v1795 = vadd.f32 %v283, %v1794
    %v1796 = vpop.f32.mrf.mxu0
    %v1797 = vpop.f32.mrf.mxu0
    %v1798 = vadd.f32 %v283, %v1797
    %v1799 = vpop.f32.mrf.mxu0
    %1800 = vmatprep.mubr.bf16.mxu0 0
    %1801 = vmatmul.mubr.bf16.gmra.mxu0 %v1110
    %v1802 = vpop.f32.mrf.mxu0
    %v1803 = vadd.f32 %v283, %v1802
    %v1804 = vpop.f32.mrf.mxu0
    %v1805 = vpop.f32.mrf.mxu0
    %v1806 = vadd.f32 %v283, %v1805
    %v1807 = vpop.f32.mrf.mxu0
    %1808 = vmatprep.mubr.bf16.mxu0 0
    %1809 = vmatmul.mubr.bf16.gmra.mxu0 %v1113
    %v1810 = vpop.f32.mrf.mxu0
    %v1811 = vadd.f32 %v283, %v1810
    %v1812 = vpop.f32.mrf.mxu0
    %v1813 = vpop.f32.mrf.mxu0
    %v1814 = vadd.f32 %v283, %v1813
    %v1815 = vpop.f32.mrf.mxu0
    %1816 = vmatprep.mubr.bf16.mxu0 0
    %1817 = vmatmul.mubr.bf16.gmra.mxu0 %v1116
    %v1818 = vpop.f32.mrf.mxu0
    %v1819 = vadd.f32 %v283, %v1818
    %v1820 = vpop.f32.mrf.mxu0
    %v1821 = vpop.f32.mrf.mxu0
    %v1822 = vadd.f32 %v283, %v1821
    %v1823 = vpop.f32.mrf.mxu0
    %1824 = vmatprep.mubr.bf16.mxu0 0
    %1825 = vmatmul.mubr.bf16.gmra.mxu0 %v1119
    %v1826 = vpop.f32.mrf.mxu0
    %v1827 = vadd.f32 %v283, %v1826
    %v1828 = vpop.f32.mrf.mxu0
    %v1829 = vpop.f32.mrf.mxu0
    %v1830 = vadd.f32 %v283, %v1829
    %v1831 = vpop.f32.mrf.mxu0
    %1832 = vmatprep.mubr.bf16.mxu0 0
    %1833 = vmatmul.mubr.bf16.gmra.mxu0 %v1122
    %v1834 = vpop.f32.mrf.mxu0
    %v1835 = vadd.f32 %v283, %v1834
    %v1836 = vpop.f32.mrf.mxu0
    %v1837 = vpop.f32.mrf.mxu0
    %v1838 = vadd.f32 %v283, %v1837
    %v1839 = vpop.f32.mrf.mxu0
    %1840 = vmatprep.mubr.bf16.mxu0 0
    %1841 = vmatmul.mubr.bf16.gmra.mxu0 %v1125
    %v1842 = vpop.f32.mrf.mxu0
    %v1843 = vadd.f32 %v283, %v1842
    %v1844 = vpop.f32.mrf.mxu0
    %v1845 = vpop.f32.mrf.mxu0
    %v1846 = vadd.f32 %v283, %v1845
    %v1847 = vpop.f32.mrf.mxu0
    %1848 = vmatprep.mubr.bf16.mxu0 0
    %1849 = vmatmul.mubr.bf16.gmra.mxu0 %v1128
    %v1850 = vpop.f32.mrf.mxu0
    %v1851 = vadd.f32 %v283, %v1850
    %v1852 = vpop.f32.mrf.mxu0
    %v1853 = vpop.f32.mrf.mxu0
    %v1854 = vadd.f32 %v283, %v1853
    %v1855 = vpop.f32.mrf.mxu0
    %1856 = vmatprep.mubr.bf16.mxu0 0
    %1857 = vmatmul.mubr.bf16.gmra.mxu0 %v1131
    %v1858 = vpop.f32.mrf.mxu0
    %v1859 = vadd.f32 %v283, %v1858
    %v1860 = vpop.f32.mrf.mxu0
    %v1861 = vpop.f32.mrf.mxu0
    %v1862 = vadd.f32 %v283, %v1861
    %v1863 = vpop.f32.mrf.mxu0
    %1864 = vmatprep.mubr.bf16.mxu0 0
    %1865 = vmatmul.mubr.bf16.gmra.mxu0 %v1134
    %v1866 = vpop.f32.mrf.mxu0
    %v1867 = vadd.f32 %v283, %v1866
    %v1868 = vpop.f32.mrf.mxu0
    %v1869 = vpop.f32.mrf.mxu0
    %v1870 = vadd.f32 %v283, %v1869
    %v1871 = vpop.f32.mrf.mxu0
    %1872 = vmatprep.mubr.bf16.mxu0 0
    %1873 = vmatmul.mubr.bf16.gmra.mxu0 %v1137
    %v1874 = vpop.f32.mrf.mxu0
    %v1875 = vadd.f32 %v283, %v1874
    %v1876 = vpop.f32.mrf.mxu0
    %v1877 = vpop.f32.mrf.mxu0
    %v1878 = vadd.f32 %v283, %v1877
    %v1879 = vpop.f32.mrf.mxu0
    %1880 = vmatprep.mubr.bf16.mxu0 0
    %1881 = vmatmul.mubr.bf16.gmra.mxu0 %v1140
    %v1882 = vpop.f32.mrf.mxu0
    %v1883 = vadd.f32 %v283, %v1882
    %v1884 = vpop.f32.mrf.mxu0
    %v1885 = vpop.f32.mrf.mxu0
    %v1886 = vadd.f32 %v283, %v1885
    %v1887 = vpop.f32.mrf.mxu0
    %1888 = vmatprep.mubr.bf16.mxu0 0
    %1889 = vmatmul.mubr.bf16.gmra.mxu0 %v1143
    %v1890 = vpop.f32.mrf.mxu0
    %v1891 = vadd.f32 %v283, %v1890
    %v1892 = vpop.f32.mrf.mxu0
    %v1893 = vpop.f32.mrf.mxu0
    %v1894 = vadd.f32 %v283, %v1893
    %v1895 = vpop.f32.mrf.mxu0
    %1896 = vmatprep.mubr.bf16.mxu0 0
    %1897 = vmatmul.mubr.bf16.gmra.mxu0 %v1146
    %v1898 = vpop.f32.mrf.mxu0
    %v1899 = vadd.f32 %v283, %v1898
    %v1900 = vpop.f32.mrf.mxu0
    %v1901 = vpop.f32.mrf.mxu0
    %v1902 = vadd.f32 %v283, %v1901
    %v1903 = vpop.f32.mrf.mxu0
    %1904 = vmatprep.mubr.bf16.mxu0 0
    %1905 = vmatmul.mubr.bf16.gmra.mxu0 %v1149
    %v1906 = vpop.f32.mrf.mxu0
    %v1907 = vadd.f32 %v283, %v1906
    %v1908 = vpop.f32.mrf.mxu0
    %v1909 = vpop.f32.mrf.mxu0
    %v1910 = vadd.f32 %v283, %v1909
    %v1911 = vpop.f32.mrf.mxu0
    %1912 = vmatprep.mubr.bf16.mxu0 0
    %1913 = vmatmul.mubr.bf16.gmra.mxu0 %v1152
    %v1914 = vpop.f32.mrf.mxu0
    %v1915 = vadd.f32 %v283, %v1914
    %v1916 = vpop.f32.mrf.mxu0
    %v1917 = vpop.f32.mrf.mxu0
    %v1918 = vadd.f32 %v283, %v1917
    %v1919 = vpop.f32.mrf.mxu0
    %1920 = vmatprep.mubr.bf16.mxu0 0
    %1921 = vmatmul.mubr.bf16.gmra.mxu0 %v1155
    %v1922 = vpop.f32.mrf.mxu0
    %v1923 = vadd.f32 %v283, %v1922
    %v1924 = vpop.f32.mrf.mxu0
    %v1925 = vpop.f32.mrf.mxu0
    %v1926 = vadd.f32 %v283, %v1925
    %v1927 = vpop.f32.mrf.mxu0
    %1928 = vmatprep.mubr.bf16.mxu0 0
    %1929 = vmatmul.mubr.bf16.gmra.mxu0 %v1158
    %v1930 = vpop.f32.mrf.mxu0
    %v1931 = vadd.f32 %v283, %v1930
    %v1932 = vpop.f32.mrf.mxu0
    %v1933 = vpop.f32.mrf.mxu0
    %v1934 = vadd.f32 %v283, %v1933
    %v1935 = vpop.f32.mrf.mxu0
    %1936 = vmatprep.mubr.bf16.mxu0 0
    %1937 = vmatmul.mubr.bf16.gmra.mxu0 %v1161
    %v1938 = vpop.f32.mrf.mxu0
    %v1939 = vadd.f32 %v283, %v1938
    %v1940 = vpop.f32.mrf.mxu0
    %v1941 = vpop.f32.mrf.mxu0
    %v1942 = vadd.f32 %v283, %v1941
    %v1943 = vpop.f32.mrf.mxu0
    %1944 = vmatprep.mubr.bf16.mxu0 0
    %1945 = vmatmul.mubr.bf16.gmra.mxu0 %v1164
    %v1946 = vpop.f32.mrf.mxu0
    %v1947 = vadd.f32 %v283, %v1946
    %v1948 = vpop.f32.mrf.mxu0
    %v1949 = vpop.f32.mrf.mxu0
    %v1950 = vadd.f32 %v283, %v1949
    %v1951 = vpop.f32.mrf.mxu0
    %1952 = vmatprep.mubr.bf16.mxu0 0
    %1953 = vmatmul.mubr.bf16.gmra.mxu0 %v1167
    %v1954 = vpop.f32.mrf.mxu0
    %v1955 = vadd.f32 %v283, %v1954
    %v1956 = vpop.f32.mrf.mxu0
    %v1957 = vpop.f32.mrf.mxu0
    %v1958 = vadd.f32 %v283, %v1957
    %v1959 = vpop.f32.mrf.mxu0
    %1960 = vmatprep.mubr.bf16.mxu0 0
    %1961 = vmatmul.mubr.bf16.gmra.mxu0 %v1170
    %v1962 = vpop.f32.mrf.mxu0
    %v1963 = vadd.f32 %v283, %v1962
    %v1964 = vpop.f32.mrf.mxu0
    %v1965 = vpop.f32.mrf.mxu0
    %v1966 = vadd.f32 %v283, %v1965
    %v1967 = vpop.f32.mrf.mxu0
    %1968 = vmatprep.mubr.bf16.mxu0 0
    %1969 = vmatmul.mubr.bf16.gmra.mxu0 %v1173
    %v1970 = vpop.f32.mrf.mxu0
    %v1971 = vadd.f32 %v283, %v1970
    %v1972 = vpop.f32.mrf.mxu0
    %v1973 = vpop.f32.mrf.mxu0
    %v1974 = vadd.f32 %v283, %v1973
    %v1975 = vpop.f32.mrf.mxu0
    %1976 = vmatprep.mubr.bf16.mxu0 0
    %1977 = vmatmul.mubr.bf16.gmra.mxu0 %v1176
    %v1978 = vpop.f32.mrf.mxu0
    %v1979 = vadd.f32 %v283, %v1978
    %v1980 = vpop.f32.mrf.mxu0
    %v1981 = vpop.f32.mrf.mxu0
    %v1982 = vadd.f32 %v283, %v1981
    %v1983 = vpop.f32.mrf.mxu0
    %1984 = vmatprep.mubr.bf16.mxu0 0
    %1985 = vmatmul.mubr.bf16.gmra.mxu0 %v1179
    %v1986 = vpop.f32.mrf.mxu0
    %v1987 = vadd.f32 %v283, %v1986
    %v1988 = vpop.f32.mrf.mxu0
    %v1989 = vpop.f32.mrf.mxu0
    %v1990 = vadd.f32 %v283, %v1989
    %v1991 = vpop.f32.mrf.mxu0
    %1992 = vmatprep.mubr.bf16.mxu0 0
    %1993 = vmatmul.mubr.bf16.gmra.mxu0 %v1182
    %v1994 = vpop.f32.mrf.mxu0
    %v1995 = vadd.f32 %v283, %v1994
    %v1996 = vpop.f32.mrf.mxu0
    %v1997 = vpop.f32.mrf.mxu0
    %v1998 = vadd.f32 %v283, %v1997
    %v1999 = vpop.f32.mrf.mxu0
    %2000 = vmatprep.mubr.bf16.mxu0 0
    %2001 = vmatmul.mubr.bf16.gmra.mxu0 %v1185
    %v2002 = vpop.f32.mrf.mxu0
    %v2003 = vadd.f32 %v283, %v2002
    %v2004 = vpop.f32.mrf.mxu0
    %v2005 = vpop.f32.mrf.mxu0
    %v2006 = vadd.f32 %v283, %v2005
    %v2007 = vpop.f32.mrf.mxu0
    %2008 = vmatprep.mubr.bf16.mxu0 0
    %2009 = vmatmul.mubr.bf16.gmra.mxu0 %v1188
    %v2010 = vpop.f32.mrf.mxu0
    %v2011 = vadd.f32 %v283, %v2010
    %v2012 = vpop.f32.mrf.mxu0
    %v2013 = vpop.f32.mrf.mxu0
    %v2014 = vadd.f32 %v283, %v2013
    %v2015 = vpop.f32.mrf.mxu0
    %2016 = vmatprep.mubr.bf16.mxu0 0
    %2017 = vmatmul.mubr.bf16.gmra.mxu0 %v1191
    %v2018 = vpop.f32.mrf.mxu0
    %v2019 = vadd.f32 %v283, %v2018
    %v2020 = vpop.f32.mrf.mxu0
    %v2021 = vpop.f32.mrf.mxu0
    %v2022 = vadd.f32 %v283, %v2021
    %v2023 = vpop.f32.mrf.mxu0
    %2024 = vmatprep.mubr.bf16.mxu0 0
    %2025 = vmatmul.mubr.bf16.gmra.mxu0 %v1194
    %v2026 = vpop.f32.mrf.mxu0
    %v2027 = vadd.f32 %v283, %v2026
    %v2028 = vpop.f32.mrf.mxu0
    %v2029 = vpop.f32.mrf.mxu0
    %v2030 = vadd.f32 %v283, %v2029
    %v2031 = vpop.f32.mrf.mxu0
    %2032 = vmatprep.mubr.bf16.mxu0 0
    %2033 = vmatmul.mubr.bf16.gmra.mxu0 %v1197
    %v2034 = vpop.f32.mrf.mxu0
    %v2035 = vadd.f32 %v283, %v2034
    %v2036 = vpop.f32.mrf.mxu0
    %v2037 = vpop.f32.mrf.mxu0
    %v2038 = vadd.f32 %v283, %v2037
    %v2039 = vpop.f32.mrf.mxu0
    %2040 = vmatprep.mubr.bf16.mxu0 0
    %2041 = vmatmul.mubr.bf16.gmra.mxu0 %v1200
    %v2042 = vpop.f32.mrf.mxu0
    %v2043 = vadd.f32 %v283, %v2042
    %v2044 = vpop.f32.mrf.mxu0
    %v2045 = vpop.f32.mrf.mxu0
    %v2046 = vadd.f32 %v283, %v2045
    %v2047 = vpop.f32.mrf.mxu0
    %2048 = vmatprep.mubr.bf16.mxu0 0
    %2049 = vmatmul.mubr.bf16.gmra.mxu0 %v1203
    %v2050 = vpop.f32.mrf.mxu0
    %v2051 = vadd.f32 %v283, %v2050
    %v2052 = vpop.f32.mrf.mxu0
    %v2053 = vpop.f32.mrf.mxu0
    %v2054 = vadd.f32 %v283, %v2053
    %v2055 = vpop.f32.mrf.mxu0
    %2056 = vmatprep.mubr.bf16.mxu0 0
    %2057 = vmatmul.mubr.bf16.gmra.mxu0 %v1206
    %v2058 = vpop.f32.mrf.mxu0
    %v2059 = vadd.f32 %v283, %v2058
    %v2060 = vpop.f32.mrf.mxu0
    %v2061 = vpop.f32.mrf.mxu0
    %v2062 = vadd.f32 %v283, %v2061
    %v2063 = vpop.f32.mrf.mxu0
    %2064 = vmatprep.mubr.bf16.mxu0 0
    %2065 = vmatmul.mubr.bf16.gmra.mxu0 %v1209
    %v2066 = vpop.f32.mrf.mxu0
    %v2067 = vadd.f32 %v283, %v2066
    %v2068 = vpop.f32.mrf.mxu0
    %v2069 = vpop.f32.mrf.mxu0
    %v2070 = vadd.f32 %v283, %v2069
    %v2071 = vpop.f32.mrf.mxu0
    %2072 = vmatprep.mubr.bf16.mxu0 0
    %2073 = vmatmul.mubr.bf16.gmra.mxu0 %v1212
    %v2074 = vpop.f32.mrf.mxu0
    %v2075 = vadd.f32 %v283, %v2074
    %v2076 = vpop.f32.mrf.mxu0
    %v2077 = vpop.f32.mrf.mxu0
    %v2078 = vadd.f32 %v283, %v2077
    %v2079 = vpop.f32.mrf.mxu0
    %2080 = vmatprep.mubr.bf16.mxu0 0
    %2081 = vmatmul.mubr.bf16.gmra.mxu0 %v1215
    %v2082 = vpop.f32.mrf.mxu0
    %v2083 = vadd.f32 %v283, %v2082
    %v2084 = vpop.f32.mrf.mxu0
    %v2085 = vpop.f32.mrf.mxu0
    %v2086 = vadd.f32 %v283, %v2085
    %v2087 = vpop.f32.mrf.mxu0
    %2088 = vmatprep.mubr.bf16.mxu0 0
    %2089 = vmatmul.mubr.bf16.gmra.mxu0 %v1218
    %v2090 = vpop.f32.mrf.mxu0
    %v2091 = vadd.f32 %v283, %v2090
    %v2092 = vpop.f32.mrf.mxu0
    %v2093 = vpop.f32.mrf.mxu0
    %v2094 = vadd.f32 %v283, %v2093
    %v2095 = vpop.f32.mrf.mxu0
    %2096 = vmatprep.mubr.bf16.mxu0 0
    %2097 = vmatmul.mubr.bf16.gmra.mxu0 %v1221
    %v2098 = vpop.f32.mrf.mxu0
    %v2099 = vadd.f32 %v283, %v2098
    %v2100 = vpop.f32.mrf.mxu0
    %v2101 = vpop.f32.mrf.mxu0
    %v2102 = vadd.f32 %v283, %v2101
    %v2103 = vpop.f32.mrf.mxu0
    %2104 = vmatprep.mubr.bf16.mxu0 0
    %2105 = vmatmul.mubr.bf16.gmra.mxu0 %v1224
    %v2106 = vpop.f32.mrf.mxu0
    %v2107 = vadd.f32 %v283, %v2106
    %v2108 = vpop.f32.mrf.mxu0
    %v2109 = vpop.f32.mrf.mxu0
    %v2110 = vadd.f32 %v283, %v2109
    %v2111 = vpop.f32.mrf.mxu0
    %2112 = vmatprep.mubr.bf16.mxu0 0
    %2113 = vmatmul.mubr.bf16.gmra.mxu0 %v1227
    %v2114 = vpop.f32.mrf.mxu0
    %v2115 = vadd.f32 %v283, %v2114
    %v2116 = vpop.f32.mrf.mxu0
    %v2117 = vpop.f32.mrf.mxu0
    %v2118 = vadd.f32 %v283, %v2117
    %v2119 = vpop.f32.mrf.mxu0
    %2120 = vmatprep.mubr.bf16.mxu0 0
    %2121 = vmatmul.mubr.bf16.gmra.mxu0 %v1230
    %v2122 = vpop.f32.mrf.mxu0
    %v2123 = vadd.f32 %v283, %v2122
    %v2124 = vpop.f32.mrf.mxu0
    %v2125 = vpop.f32.mrf.mxu0
    %v2126 = vadd.f32 %v283, %v2125
    %v2127 = vpop.f32.mrf.mxu0
    %2128 = vmatprep.mubr.bf16.mxu0 0
    %2129 = vmatmul.mubr.bf16.gmra.mxu0 %v1233
    %v2130 = vpop.f32.mrf.mxu0
    %v2131 = vadd.f32 %v283, %v2130
    %v2132 = vpop.f32.mrf.mxu0
    %v2133 = vpop.f32.mrf.mxu0
    %v2134 = vadd.f32 %v283, %v2133
    %v2135 = vpop.f32.mrf.mxu0
    %2136 = vmatprep.mubr.bf16.mxu0 0
    %2137 = vmatmul.mubr.bf16.gmra.mxu0 %v1236
    %v2138 = vpop.f32.mrf.mxu0
    %v2139 = vadd.f32 %v283, %v2138
    %v2140 = vpop.f32.mrf.mxu0
    %v2141 = vpop.f32.mrf.mxu0
    %v2142 = vadd.f32 %v283, %v2141
    %v2143 = vpop.f32.mrf.mxu0
    %2144 = vmatprep.mubr.bf16.mxu0 0
    %2145 = vmatmul.mubr.bf16.gmra.mxu0 %v1239
    %v2146 = vpop.f32.mrf.mxu0
    %v2147 = vadd.f32 %v283, %v2146
    %v2148 = vpop.f32.mrf.mxu0
    %v2149 = vpop.f32.mrf.mxu0
    %v2150 = vadd.f32 %v283, %v2149
    %v2151 = vpop.f32.mrf.mxu0
    %2152 = vmatprep.mubr.bf16.mxu0 0
    %2153 = vmatmul.mubr.bf16.gmra.mxu0 %v1242
    %v2154 = vpop.f32.mrf.mxu0
    %v2155 = vadd.f32 %v283, %v2154
    %v2156 = vpop.f32.mrf.mxu0
    %v2157 = vpop.f32.mrf.mxu0
    %v2158 = vadd.f32 %v283, %v2157
    %v2159 = vpop.f32.mrf.mxu0
    %2160 = vmatprep.mubr.bf16.mxu0 0
    %2161 = vmatmul.mubr.bf16.gmra.mxu0 %v1245
    %v2162 = vpop.f32.mrf.mxu0
    %v2163 = vadd.f32 %v283, %v2162
    %v2164 = vpop.f32.mrf.mxu0
    %v2165 = vpop.f32.mrf.mxu0
    %v2166 = vadd.f32 %v283, %v2165
    %v2167 = vpop.f32.mrf.mxu0
    %2168 = vmatprep.mubr.bf16.mxu0 0
    %2169 = vmatmul.mubr.bf16.gmra.mxu0 %v1248
    %v2170 = vpop.f32.mrf.mxu0
    %v2171 = vadd.f32 %v283, %v2170
    %v2172 = vpop.f32.mrf.mxu0
    %v2173 = vpop.f32.mrf.mxu0
    %v2174 = vadd.f32 %v283, %v2173
    %v2175 = vpop.f32.mrf.mxu0
    %2176 = vmatprep.mubr.bf16.mxu0 0
    %2177 = vmatmul.mubr.bf16.gmra.mxu0 %v1251
    %v2178 = vpop.f32.mrf.mxu0
    %v2179 = vadd.f32 %v283, %v2178
    %v2180 = vpop.f32.mrf.mxu0
    %v2181 = vpop.f32.mrf.mxu0
    %v2182 = vadd.f32 %v283, %v2181
    %v2183 = vpop.f32.mrf.mxu0
    %2184 = vmatprep.mubr.bf16.mxu0 0
    %2185 = vmatmul.mubr.bf16.gmra.mxu0 %v1254
    %v2186 = vpop.f32.mrf.mxu0
    %v2187 = vadd.f32 %v283, %v2186
    %v2188 = vpop.f32.mrf.mxu0
    %v2189 = vpop.f32.mrf.mxu0
    %v2190 = vadd.f32 %v283, %v2189
    %v2191 = vpop.f32.mrf.mxu0
    %2192 = vmatprep.mubr.bf16.mxu0 0
    %2193 = vmatmul.mubr.bf16.gmra.mxu0 %v1257
    %v2194 = vpop.f32.mrf.mxu0
    %v2195 = vadd.f32 %v283, %v2194
    %v2196 = vpop.f32.mrf.mxu0
    %v2197 = vpop.f32.mrf.mxu0
    %v2198 = vadd.f32 %v283, %v2197
    %v2199 = vpop.f32.mrf.mxu0
    %2200 = vmatprep.mubr.bf16.mxu0 0
    %2201 = vmatmul.mubr.bf16.gmra.mxu0 %v1260
    %v2202 = vpop.f32.mrf.mxu0
    %v2203 = vadd.f32 %v283, %v2202
    %v2204 = vpop.f32.mrf.mxu0
    %v2205 = vpop.f32.mrf.mxu0
    %v2206 = vadd.f32 %v283, %v2205
    %v2207 = vpop.f32.mrf.mxu0
    %2208 = vmatprep.mubr.bf16.mxu0 0
    %2209 = vmatmul.mubr.bf16.gmra.mxu0 %v1263
    %v2210 = vpop.f32.mrf.mxu0
    %v2211 = vadd.f32 %v283, %v2210
    %v2212 = vpop.f32.mrf.mxu0
    %v2213 = vpop.f32.mrf.mxu0
    %v2214 = vadd.f32 %v283, %v2213
    %v2215 = vpop.f32.mrf.mxu0
    %2216 = vmatprep.mubr.bf16.mxu0 0
    %2217 = vmatmul.mubr.bf16.gmra.mxu0 %v1266
    %v2218 = vpop.f32.mrf.mxu0
    %v2219 = vadd.f32 %v283, %v2218
    %v2220 = vpop.f32.mrf.mxu0
    %v2221 = vpop.f32.mrf.mxu0
    %v2222 = vadd.f32 %v283, %v2221
    %v2223 = vpop.f32.mrf.mxu0
    %2224 = vmatprep.mubr.bf16.mxu0 0
    %2225 = vmatmul.mubr.bf16.gmra.mxu0 %v1269
    %v2226 = vpop.f32.mrf.mxu0
    %v2227 = vadd.f32 %v283, %v2226
    %v2228 = vpop.f32.mrf.mxu0
    %v2229 = vpop.f32.mrf.mxu0
    %v2230 = vadd.f32 %v283, %v2229
    %v2231 = vpop.f32.mrf.mxu0
    %2232 = vmatprep.mubr.bf16.mxu0 0
    %2233 = vmatmul.mubr.bf16.gmra.mxu0 %v1272
    %v2234 = vpop.f32.mrf.mxu0
    %v2235 = vadd.f32 %v283, %v2234
    %v2236 = vpop.f32.mrf.mxu0
    %v2237 = vpop.f32.mrf.mxu0
    %v2238 = vadd.f32 %v283, %v2237
    %v2239 = vpop.f32.mrf.mxu0
    %2240 = vmatprep.mubr.bf16.mxu0 0
    %2241 = vmatmul.mubr.bf16.gmra.mxu0 %v1275
    %v2242 = vpop.f32.mrf.mxu0
    %v2243 = vadd.f32 %v283, %v2242
    %v2244 = vpop.f32.mrf.mxu0
    %v2245 = vpop.f32.mrf.mxu0
    %v2246 = vadd.f32 %v283, %v2245
    %v2247 = vpop.f32.mrf.mxu0
    %2248 = vmatprep.mubr.bf16.mxu0 0
    %2249 = vmatmul.mubr.bf16.gmra.mxu0 %v1278
    %v2250 = vpop.f32.mrf.mxu0
    %v2251 = vadd.f32 %v283, %v2250
    %v2252 = vpop.f32.mrf.mxu0
    %v2253 = vpop.f32.mrf.mxu0
    %v2254 = vadd.f32 %v283, %v2253
    %v2255 = vpop.f32.mrf.mxu0
    %2256 = vmatprep.mubr.bf16.mxu0 0
    %2257 = vmatmul.mubr.bf16.gmra.mxu0 %v1281
    %v2258 = vpop.f32.mrf.mxu0
    %v2259 = vadd.f32 %v283, %v2258
    %v2260 = vpop.f32.mrf.mxu0
    %v2261 = vpop.f32.mrf.mxu0
    %v2262 = vadd.f32 %v283, %v2261
    %v2263 = vpop.f32.mrf.mxu0
    %2264 = vmatprep.mubr.bf16.mxu0 0
    %2265 = vmatmul.mubr.bf16.gmra.mxu0 %v1284
    %v2266 = vpop.f32.mrf.mxu0
    %v2267 = vadd.f32 %v283, %v2266
    %v2268 = vpop.f32.mrf.mxu0
    %v2269 = vpop.f32.mrf.mxu0
    %v2270 = vadd.f32 %v283, %v2269
    %v2271 = vpop.f32.mrf.mxu0
    %2272 = vmatprep.mubr.bf16.mxu0 0
    %2273 = vmatmul.mubr.bf16.gmra.mxu0 %v1287
    %v2274 = vpop.f32.mrf.mxu0
    %v2275 = vadd.f32 %v283, %v2274
    %v2276 = vpop.f32.mrf.mxu0
    %v2277 = vpop.f32.mrf.mxu0
    %v2278 = vadd.f32 %v283, %v2277
    %v2279 = vpop.f32.mrf.mxu0
    %2280 = vmatprep.mubr.bf16.mxu0 0
    %2281 = vmatmul.mubr.bf16.gmra.mxu0 %v1290
    %v2282 = vpop.f32.mrf.mxu0
    %v2283 = vadd.f32 %v283, %v2282
    %v2284 = vpop.f32.mrf.mxu0
    %v2285 = vpop.f32.mrf.mxu0
    %v2286 = vadd.f32 %v283, %v2285
    %v2287 = vpop.f32.mrf.mxu0
    %2288 = vmatprep.mubr.bf16.mxu0 0
    %2289 = vmatmul.mubr.bf16.gmra.mxu0 %v1293
    %v2290 = vpop.f32.mrf.mxu0
    %v2291 = vadd.f32 %v283, %v2290
    %v2292 = vpop.f32.mrf.mxu0
    %v2293 = vpop.f32.mrf.mxu0
    %v2294 = vadd.f32 %v283, %v2293
    %v2295 = vpop.f32.mrf.mxu0
    %2296 = vmatprep.mubr.bf16.mxu0 0
    %2297 = vmatmul.mubr.bf16.gmra.mxu0 %v1296
    %v2298 = vpop.f32.mrf.mxu0
    %v2299 = vadd.f32 %v283, %v2298
    %v2300 = vpop.f32.mrf.mxu0
    %v2301 = vpop.f32.mrf.mxu0
    %v2302 = vadd.f32 %v283, %v2301
    %v2303 = vpop.f32.mrf.mxu0
    %2304 = vmatprep.mubr.bf16.mxu0 0
    %2305 = vmatmul.mubr.bf16.gmra.mxu0 %v1299
    %v2306 = vpop.f32.mrf.mxu0
    %v2307 = vadd.f32 %v283, %v2306
    %v2308 = vpop.f32.mrf.mxu0
    %v2309 = vpop.f32.mrf.mxu0
    %v2310 = vadd.f32 %v283, %v2309
    %v2311 = vpop.f32.mrf.mxu0
    %2312 = vmatprep.mubr.bf16.mxu0 0
    %2313 = vmatmul.mubr.bf16.gmra.mxu0 %v1302
    %v2314 = vpop.f32.mrf.mxu0
    %v2315 = vadd.f32 %v283, %v2314
    %v2316 = vpop.f32.mrf.mxu0
    %v2317 = vpop.f32.mrf.mxu0
    %v2318 = vadd.f32 %v283, %v2317
    %v2319 = vpop.f32.mrf.mxu0
    %2320 = vmatprep.mubr.bf16.mxu0 0
    %2321 = vmatmul.mubr.bf16.gmra.mxu0 %v1305
    %v2322 = vpop.f32.mrf.mxu0
    %v2323 = vadd.f32 %v283, %v2322
    %v2324 = vpop.f32.mrf.mxu0
    %v2325 = vpop.f32.mrf.mxu0
    %v2326 = vadd.f32 %v283, %v2325
    %v2327 = vpop.f32.mrf.mxu0
    %2328 = vmatprep.mubr.bf16.mxu0 0
    %2329 = vmatmul.mubr.bf16.gmra.mxu0 %v1308
    %v2330 = vpop.f32.mrf.mxu0
    %v2331 = vadd.f32 %v283, %v2330
    %v2332 = vpop.f32.mrf.mxu0
    %v2333 = vpop.f32.mrf.mxu0
    %v2334 = vadd.f32 %v283, %v2333
    %v2335 = vpop.f32.mrf.mxu0
    %2336 = vmatprep.mubr.bf16.mxu0 0
    %2337 = vmatmul.mubr.bf16.gmra.mxu0 %v1311
    %v2338 = vpop.f32.mrf.mxu0
    %v2339 = vadd.f32 %v283, %v2338
    %v2340 = vpop.f32.mrf.mxu0
    %v2341 = vpop.f32.mrf.mxu0
    %v2342 = vadd.f32 %v283, %v2341
    %v2343 = vpop.f32.mrf.mxu0
    %2344 = vmatprep.mubr.bf16.mxu0 0
    %2345 = vmatmul.mubr.bf16.gmra.mxu0 %v1314
    %v2346 = vpop.f32.mrf.mxu0
    %v2347 = vadd.f32 %v283, %v2346
    %v2348 = vpop.f32.mrf.mxu0
    %v2349 = vpop.f32.mrf.mxu0
    %v2350 = vadd.f32 %v283, %v2349
    %v2351 = vpop.f32.mrf.mxu0
    %2352 = vmatprep.mubr.bf16.mxu0 0
    %2353 = vmatmul.mubr.bf16.gmra.mxu0 %v1317
    %v2354 = vpop.f32.mrf.mxu0
    %v2355 = vadd.f32 %v283, %v2354
    %v2356 = vpop.f32.mrf.mxu0
    %v2357 = vpop.f32.mrf.mxu0
    %v2358 = vadd.f32 %v283, %v2357
    %v2359 = vpop.f32.mrf.mxu0
    %2360 = vmatprep.mubr.bf16.mxu0 0
    %2361 = vmatmul.mubr.bf16.gmra.mxu0 %v1320
    %v2362 = vpop.f32.mrf.mxu0
    %v2363 = vadd.f32 %v283, %v2362
    %v2364 = vpop.f32.mrf.mxu0
    %v2365 = vpop.f32.mrf.mxu0
    %v2366 = vadd.f32 %v283, %v2365
    %v2367 = vpop.f32.mrf.mxu0
    %2368 = vmatprep.mubr.bf16.mxu0 0
    %2369 = vmatmul.mubr.bf16.gmra.mxu0 %v1323
    %v2370 = vpop.f32.mrf.mxu0
    %v2371 = vadd.f32 %v283, %v2370
    %v2372 = vpop.f32.mrf.mxu0
    %v2373 = vpop.f32.mrf.mxu0
    %v2374 = vadd.f32 %v283, %v2373
    %v2375 = vpop.f32.mrf.mxu0
    %2376 = vmatprep.mubr.bf16.mxu0 0
    %2377 = vmatmul.mubr.bf16.gmra.mxu0 %v1326
    %v2378 = vpop.f32.mrf.mxu0
    %v2379 = vadd.f32 %v283, %v2378
    %v2380 = vpop.f32.mrf.mxu0
    %v2381 = vpop.f32.mrf.mxu0
    %v2382 = vadd.f32 %v283, %v2381
    %v2383 = vpop.f32.mrf.mxu0
    %2384 = vdwg.mxu0
    %v2385 = vmul.f32 %v1363, 0.2
    %v2386 = vmul.f32 %v1366, 0.2
    %v2387 = vmul.f32 %v1371, 0.2
    %v2388 = vmul.f32 %v1374, 0.2
    %v2389 = vmul.f32 %v1379, 0.2
    %v2390 = vmul.f32 %v1382, 0.2
    %v2391 = vmul.f32 %v1387, 0.2
    %v2392 = vmul.f32 %v1390, 0.2
    %v2393 = vmul.f32 %v1395, 0.2
    %v2394 = vmul.f32 %v1398, 0.2
    %v2395 = vmul.f32 %v1403, 0.2
    %v2396 = vmul.f32 %v1406, 0.2
    %v2397 = vmul.f32 %v1411, 0.2
    %v2398 = vmul.f32 %v1414, 0.2
    %v2399 = vmul.f32 %v1419, 0.2
    %v2400 = vmul.f32 %v1422, 0.2
    %v2401 = vmul.f32 %v1427, 0.2
    %v2402 = vmul.f32 %v1430, 0.2
    %v2403 = vmul.f32 %v1435, 0.2
    %v2404 = vmul.f32 %v1438, 0.2
    %v2405 = vmul.f32 %v1443, 0.2
    %v2406 = vmul.f32 %v1446, 0.2
    %v2407 = vmul.f32 %v1451, 0.2
    %v2408 = vmul.f32 %v1454, 0.2
    %v2409 = vmul.f32 %v1459, 0.2
    %v2410 = vmul.f32 %v1462, 0.2
    %v2411 = vmul.f32 %v1467, 0.2
    %v2412 = vmul.f32 %v1470, 0.2
    %v2413 = vmul.f32 %v1475, 0.2
    %v2414 = vmul.f32 %v1478, 0.2
    %v2415 = vmul.f32 %v1483, 0.2
    %v2416 = vmul.f32 %v1486, 0.2
    %v2417 = vmul.f32 %v1491, 0.2
    %v2418 = vmul.f32 %v1494, 0.2
    %v2419 = vmul.f32 %v1499, 0.2
    %v2420 = vmul.f32 %v1502, 0.2
    %v2421 = vmul.f32 %v1507, 0.2
    %v2422 = vmul.f32 %v1510, 0.2
    %v2423 = vmul.f32 %v1515, 0.2
    %v2424 = vmul.f32 %v1518, 0.2
    %v2425 = vmul.f32 %v1523, 0.2
    %v2426 = vmul.f32 %v1526, 0.2
    %v2427 = vmul.f32 %v1531, 0.2
    %v2428 = vmul.f32 %v1534, 0.2
    %v2429 = vmul.f32 %v1539, 0.2
    %v2430 = vmul.f32 %v1542, 0.2
    %v2431 = vmul.f32 %v1547, 0.2
    %v2432 = vmul.f32 %v1550, 0.2
    %v2433 = vmul.f32 %v1555, 0.2
    %v2434 = vmul.f32 %v1558, 0.2
    %v2435 = vmul.f32 %v1563, 0.2
    %v2436 = vmul.f32 %v1566, 0.2
    %v2437 = vmul.f32 %v1571, 0.2
    %v2438 = vmul.f32 %v1574, 0.2
    %v2439 = vmul.f32 %v1579, 0.2
    %v2440 = vmul.f32 %v1582, 0.2
    %v2441 = vmul.f32 %v1587, 0.2
    %v2442 = vmul.f32 %v1590, 0.2
    %v2443 = vmul.f32 %v1595, 0.2
    %v2444 = vmul.f32 %v1598, 0.2
    %v2445 = vmul.f32 %v1603, 0.2
    %v2446 = vmul.f32 %v1606, 0.2
    %v2447 = vmul.f32 %v1611, 0.2
    %v2448 = vmul.f32 %v1614, 0.2
    %v2449 = vmul.f32 %v1619, 0.2
    %v2450 = vmul.f32 %v1622, 0.2
    %v2451 = vmul.f32 %v1627, 0.2
    %v2452 = vmul.f32 %v1630, 0.2
    %v2453 = vmul.f32 %v1635, 0.2
    %v2454 = vmul.f32 %v1638, 0.2
    %v2455 = vmul.f32 %v1643, 0.2
    %v2456 = vmul.f32 %v1646, 0.2
    %v2457 = vmul.f32 %v1651, 0.2
    %v2458 = vmul.f32 %v1654, 0.2
    %v2459 = vmul.f32 %v1659, 0.2
    %v2460 = vmul.f32 %v1662, 0.2
    %v2461 = vmul.f32 %v1667, 0.2
    %v2462 = vmul.f32 %v1670, 0.2
    %v2463 = vmul.f32 %v1675, 0.2
    %v2464 = vmul.f32 %v1678, 0.2
    %v2465 = vmul.f32 %v1683, 0.2
    %v2466 = vmul.f32 %v1686, 0.2
    %v2467 = vmul.f32 %v1691, 0.2
    %v2468 = vmul.f32 %v1694, 0.2
    %v2469 = vmul.f32 %v1699, 0.2
    %v2470 = vmul.f32 %v1702, 0.2
    %v2471 = vmul.f32 %v1707, 0.2
    %v2472 = vmul.f32 %v1710, 0.2
    %v2473 = vmul.f32 %v1715, 0.2
    %v2474 = vmul.f32 %v1718, 0.2
    %v2475 = vmul.f32 %v1723, 0.2
    %v2476 = vmul.f32 %v1726, 0.2
    %v2477 = vmul.f32 %v1731, 0.2
    %v2478 = vmul.f32 %v1734, 0.2
    %v2479 = vmul.f32 %v1739, 0.2
    %v2480 = vmul.f32 %v1742, 0.2
    %v2481 = vmul.f32 %v1747, 0.2
    %v2482 = vmul.f32 %v1750, 0.2
    %v2483 = vmul.f32 %v1755, 0.2
    %v2484 = vmul.f32 %v1758, 0.2
    %v2485 = vmul.f32 %v1763, 0.2
    %v2486 = vmul.f32 %v1766, 0.2
    %v2487 = vmul.f32 %v1771, 0.2
    %v2488 = vmul.f32 %v1774, 0.2
    %v2489 = vmul.f32 %v1779, 0.2
    %v2490 = vmul.f32 %v1782, 0.2
    %v2491 = vmul.f32 %v1787, 0.2
    %v2492 = vmul.f32 %v1790, 0.2
    %v2493 = vmul.f32 %v1795, 0.2
    %v2494 = vmul.f32 %v1798, 0.2
    %v2495 = vmul.f32 %v1803, 0.2
    %v2496 = vmul.f32 %v1806, 0.2
    %v2497 = vmul.f32 %v1811, 0.2
    %v2498 = vmul.f32 %v1814, 0.2
    %v2499 = vmul.f32 %v1819, 0.2
    %v2500 = vmul.f32 %v1822, 0.2
    %v2501 = vmul.f32 %v1827, 0.2
    %v2502 = vmul.f32 %v1830, 0.2
    %v2503 = vmul.f32 %v1835, 0.2
    %v2504 = vmul.f32 %v1838, 0.2
    %v2505 = vmul.f32 %v1843, 0.2
    %v2506 = vmul.f32 %v1846, 0.2
    %v2507 = vmul.f32 %v1851, 0.2
    %v2508 = vmul.f32 %v1854, 0.2
    %v2509 = vmul.f32 %v1859, 0.2
    %v2510 = vmul.f32 %v1862, 0.2
    %v2511 = vmul.f32 %v1867, 0.2
    %v2512 = vmul.f32 %v1870, 0.2
    %v2513 = vmul.f32 %v1875, 0.2
    %v2514 = vmul.f32 %v1878, 0.2
    %v2515 = vmul.f32 %v1883, 0.2
    %v2516 = vmul.f32 %v1886, 0.2
    %v2517 = vmul.f32 %v1891, 0.2
    %v2518 = vmul.f32 %v1894, 0.2
    %v2519 = vmul.f32 %v1899, 0.2
    %v2520 = vmul.f32 %v1902, 0.2
    %v2521 = vmul.f32 %v1907, 0.2
    %v2522 = vmul.f32 %v1910, 0.2
    %v2523 = vmul.f32 %v1915, 0.2
    %v2524 = vmul.f32 %v1918, 0.2
    %v2525 = vmul.f32 %v1923, 0.2
    %v2526 = vmul.f32 %v1926, 0.2
    %v2527 = vmul.f32 %v1931, 0.2
    %v2528 = vmul.f32 %v1934, 0.2
    %v2529 = vmul.f32 %v1939, 0.2
    %v2530 = vmul.f32 %v1942, 0.2
    %v2531 = vmul.f32 %v1947, 0.2
    %v2532 = vmul.f32 %v1950, 0.2
    %v2533 = vmul.f32 %v1955, 0.2
    %v2534 = vmul.f32 %v1958, 0.2
    %v2535 = vmul.f32 %v1963, 0.2
    %v2536 = vmul.f32 %v1966, 0.2
    %v2537 = vmul.f32 %v1971, 0.2
    %v2538 = vmul.f32 %v1974, 0.2
    %v2539 = vmul.f32 %v1979, 0.2
    %v2540 = vmul.f32 %v1982, 0.2
    %v2541 = vmul.f32 %v1987, 0.2
    %v2542 = vmul.f32 %v1990, 0.2
    %v2543 = vmul.f32 %v1995, 0.2
    %v2544 = vmul.f32 %v1998, 0.2
    %v2545 = vmul.f32 %v2003, 0.2
    %v2546 = vmul.f32 %v2006, 0.2
    %v2547 = vmul.f32 %v2011, 0.2
    %v2548 = vmul.f32 %v2014, 0.2
    %v2549 = vmul.f32 %v2019, 0.2
    %v2550 = vmul.f32 %v2022, 0.2
    %v2551 = vmul.f32 %v2027, 0.2
    %v2552 = vmul.f32 %v2030, 0.2
    %v2553 = vmul.f32 %v2035, 0.2
    %v2554 = vmul.f32 %v2038, 0.2
    %v2555 = vmul.f32 %v2043, 0.2
    %v2556 = vmul.f32 %v2046, 0.2
    %v2557 = vmul.f32 %v2051, 0.2
    %v2558 = vmul.f32 %v2054, 0.2
    %v2559 = vmul.f32 %v2059, 0.2
    %v2560 = vmul.f32 %v2062, 0.2
    %v2561 = vmul.f32 %v2067, 0.2
    %v2562 = vmul.f32 %v2070, 0.2
    %v2563 = vmul.f32 %v2075, 0.2
    %v2564 = vmul.f32 %v2078, 0.2
    %v2565 = vmul.f32 %v2083, 0.2
    %v2566 = vmul.f32 %v2086, 0.2
    %v2567 = vmul.f32 %v2091, 0.2
    %v2568 = vmul.f32 %v2094, 0.2
    %v2569 = vmul.f32 %v2099, 0.2
    %v2570 = vmul.f32 %v2102, 0.2
    %v2571 = vmul.f32 %v2107, 0.2
    %v2572 = vmul.f32 %v2110, 0.2
    %v2573 = vmul.f32 %v2115, 0.2
    %v2574 = vmul.f32 %v2118, 0.2
    %v2575 = vmul.f32 %v2123, 0.2
    %v2576 = vmul.f32 %v2126, 0.2
    %v2577 = vmul.f32 %v2131, 0.2
    %v2578 = vmul.f32 %v2134, 0.2
    %v2579 = vmul.f32 %v2139, 0.2
    %v2580 = vmul.f32 %v2142, 0.2
    %v2581 = vmul.f32 %v2147, 0.2
    %v2582 = vmul.f32 %v2150, 0.2
    %v2583 = vmul.f32 %v2155, 0.2
    %v2584 = vmul.f32 %v2158, 0.2
    %v2585 = vmul.f32 %v2163, 0.2
    %v2586 = vmul.f32 %v2166, 0.2
    %v2587 = vmul.f32 %v2171, 0.2
    %v2588 = vmul.f32 %v2174, 0.2
    %v2589 = vmul.f32 %v2179, 0.2
    %v2590 = vmul.f32 %v2182, 0.2
    %v2591 = vmul.f32 %v2187, 0.2
    %v2592 = vmul.f32 %v2190, 0.2
    %v2593 = vmul.f32 %v2195, 0.2
    %v2594 = vmul.f32 %v2198, 0.2
    %v2595 = vmul.f32 %v2203, 0.2
    %v2596 = vmul.f32 %v2206, 0.2
    %v2597 = vmul.f32 %v2211, 0.2
    %v2598 = vmul.f32 %v2214, 0.2
    %v2599 = vmul.f32 %v2219, 0.2
    %v2600 = vmul.f32 %v2222, 0.2
    %v2601 = vmul.f32 %v2227, 0.2
    %v2602 = vmul.f32 %v2230, 0.2
    %v2603 = vmul.f32 %v2235, 0.2
    %v2604 = vmul.f32 %v2238, 0.2
    %v2605 = vmul.f32 %v2243, 0.2
    %v2606 = vmul.f32 %v2246, 0.2
    %v2607 = vmul.f32 %v2251, 0.2
    %v2608 = vmul.f32 %v2254, 0.2
    %v2609 = vmul.f32 %v2259, 0.2
    %v2610 = vmul.f32 %v2262, 0.2
    %v2611 = vmul.f32 %v2267, 0.2
    %v2612 = vmul.f32 %v2270, 0.2
    %v2613 = vmul.f32 %v2275, 0.2
    %v2614 = vmul.f32 %v2278, 0.2
    %v2615 = vmul.f32 %v2283, 0.2
    %v2616 = vmul.f32 %v2286, 0.2
    %v2617 = vmul.f32 %v2291, 0.2
    %v2618 = vmul.f32 %v2294, 0.2
    %v2619 = vmul.f32 %v2299, 0.2
    %v2620 = vmul.f32 %v2302, 0.2
    %v2621 = vmul.f32 %v2307, 0.2
    %v2622 = vmul.f32 %v2310, 0.2
    %v2623 = vmul.f32 %v2315, 0.2
    %v2624 = vmul.f32 %v2318, 0.2
    %v2625 = vmul.f32 %v2323, 0.2
    %v2626 = vmul.f32 %v2326, 0.2
    %v2627 = vmul.f32 %v2331, 0.2
    %v2628 = vmul.f32 %v2334, 0.2
    %v2629 = vmul.f32 %v2339, 0.2
    %v2630 = vmul.f32 %v2342, 0.2
    %v2631 = vmul.f32 %v2347, 0.2
    %v2632 = vmul.f32 %v2350, 0.2
    %v2633 = vmul.f32 %v2355, 0.2
    %v2634 = vmul.f32 %v2358, 0.2
    %v2635 = vmul.f32 %v2363, 0.2
    %v2636 = vmul.f32 %v2366, 0.2
    %v2637 = vmul.f32 %v2371, 0.2
    %v2638 = vmul.f32 %v2374, 0.2
    %v2639 = vmul.f32 %v2379, 0.2
    %v2640 = vmul.f32 %v2382, 0.2
    %v2641 = vmax.f32 %v1363, %v2385
    %v2642 = vmax.f32 %v1366, %v2386
    %v2643 = vmax.f32 %v1371, %v2387
    %v2644 = vmax.f32 %v1374, %v2388
    %v2645 = vmax.f32 %v1379, %v2389
    %v2646 = vmax.f32 %v1382, %v2390
    %v2647 = vmax.f32 %v1387, %v2391
    %v2648 = vmax.f32 %v1390, %v2392
    %v2649 = vmax.f32 %v1395, %v2393
    %v2650 = vmax.f32 %v1398, %v2394
    %v2651 = vmax.f32 %v1403, %v2395
    %v2652 = vmax.f32 %v1406, %v2396
    %v2653 = vmax.f32 %v1411, %v2397
    %v2654 = vmax.f32 %v1414, %v2398
    %v2655 = vmax.f32 %v1419, %v2399
    %v2656 = vmax.f32 %v1422, %v2400
    %v2657 = vmax.f32 %v1427, %v2401
    %v2658 = vmax.f32 %v1430, %v2402
    %v2659 = vmax.f32 %v1435, %v2403
    %v2660 = vmax.f32 %v1438, %v2404
    %v2661 = vmax.f32 %v1443, %v2405
    %v2662 = vmax.f32 %v1446, %v2406
    %v2663 = vmax.f32 %v1451, %v2407
    %v2664 = vmax.f32 %v1454, %v2408
    %v2665 = vmax.f32 %v1459, %v2409
    %v2666 = vmax.f32 %v1462, %v2410
    %v2667 = vmax.f32 %v1467, %v2411
    %v2668 = vmax.f32 %v1470, %v2412
    %v2669 = vmax.f32 %v1475, %v2413
    %v2670 = vmax.f32 %v1478, %v2414
    %v2671 = vmax.f32 %v1483, %v2415
    %v2672 = vmax.f32 %v1486, %v2416
    %v2673 = vmax.f32 %v1491, %v2417
    %v2674 = vmax.f32 %v1494, %v2418
    %v2675 = vmax.f32 %v1499, %v2419
    %v2676 = vmax.f32 %v1502, %v2420
    %v2677 = vmax.f32 %v1507, %v2421
    %v2678 = vmax.f32 %v1510, %v2422
    %v2679 = vmax.f32 %v1515, %v2423
    %v2680 = vmax.f32 %v1518, %v2424
    %v2681 = vmax.f32 %v1523, %v2425
    %v2682 = vmax.f32 %v1526, %v2426
    %v2683 = vmax.f32 %v1531, %v2427
    %v2684 = vmax.f32 %v1534, %v2428
    %v2685 = vmax.f32 %v1539, %v2429
    %v2686 = vmax.f32 %v1542, %v2430
    %v2687 = vmax.f32 %v1547, %v2431
    %v2688 = vmax.f32 %v1550, %v2432
    %v2689 = vmax.f32 %v1555, %v2433
    %v2690 = vmax.f32 %v1558, %v2434
    %v2691 = vmax.f32 %v1563, %v2435
    %v2692 = vmax.f32 %v1566, %v2436
    %v2693 = vmax.f32 %v1571, %v2437
    %v2694 = vmax.f32 %v1574, %v2438
    %v2695 = vmax.f32 %v1579, %v2439
    %v2696 = vmax.f32 %v1582, %v2440
    %v2697 = vmax.f32 %v1587, %v2441
    %v2698 = vmax.f32 %v1590, %v2442
    %v2699 = vmax.f32 %v1595, %v2443
    %v2700 = vmax.f32 %v1598, %v2444
    %v2701 = vmax.f32 %v1603, %v2445
    %v2702 = vmax.f32 %v1606, %v2446
    %v2703 = vmax.f32 %v1611, %v2447
    %v2704 = vmax.f32 %v1614, %v2448
    %v2705 = vmax.f32 %v1619, %v2449
    %v2706 = vmax.f32 %v1622, %v2450
    %v2707 = vmax.f32 %v1627, %v2451
    %v2708 = vmax.f32 %v1630, %v2452
    %v2709 = vmax.f32 %v1635, %v2453
    %v2710 = vmax.f32 %v1638, %v2454
    %v2711 = vmax.f32 %v1643, %v2455
    %v2712 = vmax.f32 %v1646, %v2456
    %v2713 = vmax.f32 %v1651, %v2457
    %v2714 = vmax.f32 %v1654, %v2458
    %v2715 = vmax.f32 %v1659, %v2459
    %v2716 = vmax.f32 %v1662, %v2460
    %v2717 = vmax.f32 %v1667, %v2461
    %v2718 = vmax.f32 %v1670, %v2462
    %v2719 = vmax.f32 %v1675, %v2463
    %v2720 = vmax.f32 %v1678, %v2464
    %v2721 = vmax.f32 %v1683, %v2465
    %v2722 = vmax.f32 %v1686, %v2466
    %v2723 = vmax.f32 %v1691, %v2467
    %v2724 = vmax.f32 %v1694, %v2468
    %v2725 = vmax.f32 %v1699, %v2469
    %v2726 = vmax.f32 %v1702, %v2470
    %v2727 = vmax.f32 %v1707, %v2471
    %v2728 = vmax.f32 %v1710, %v2472
    %v2729 = vmax.f32 %v1715, %v2473
    %v2730 = vmax.f32 %v1718, %v2474
    %v2731 = vmax.f32 %v1723, %v2475
    %v2732 = vmax.f32 %v1726, %v2476
    %v2733 = vmax.f32 %v1731, %v2477
    %v2734 = vmax.f32 %v1734, %v2478
    %v2735 = vmax.f32 %v1739, %v2479
    %v2736 = vmax.f32 %v1742, %v2480
    %v2737 = vmax.f32 %v1747, %v2481
    %v2738 = vmax.f32 %v1750, %v2482
    %v2739 = vmax.f32 %v1755, %v2483
    %v2740 = vmax.f32 %v1758, %v2484
    %v2741 = vmax.f32 %v1763, %v2485
    %v2742 = vmax.f32 %v1766, %v2486
    %v2743 = vmax.f32 %v1771, %v2487
    %v2744 = vmax.f32 %v1774, %v2488
    %v2745 = vmax.f32 %v1779, %v2489
    %v2746 = vmax.f32 %v1782, %v2490
    %v2747 = vmax.f32 %v1787, %v2491
    %v2748 = vmax.f32 %v1790, %v2492
    %v2749 = vmax.f32 %v1795, %v2493
    %v2750 = vmax.f32 %v1798, %v2494
    %v2751 = vmax.f32 %v1803, %v2495
    %v2752 = vmax.f32 %v1806, %v2496
    %v2753 = vmax.f32 %v1811, %v2497
    %v2754 = vmax.f32 %v1814, %v2498
    %v2755 = vmax.f32 %v1819, %v2499
    %v2756 = vmax.f32 %v1822, %v2500
    %v2757 = vmax.f32 %v1827, %v2501
    %v2758 = vmax.f32 %v1830, %v2502
    %v2759 = vmax.f32 %v1835, %v2503
    %v2760 = vmax.f32 %v1838, %v2504
    %v2761 = vmax.f32 %v1843, %v2505
    %v2762 = vmax.f32 %v1846, %v2506
    %v2763 = vmax.f32 %v1851, %v2507
    %v2764 = vmax.f32 %v1854, %v2508
    %v2765 = vmax.f32 %v1859, %v2509
    %v2766 = vmax.f32 %v1862, %v2510
    %v2767 = vmax.f32 %v1867, %v2511
    %v2768 = vmax.f32 %v1870, %v2512
    %v2769 = vmax.f32 %v1875, %v2513
    %v2770 = vmax.f32 %v1878, %v2514
    %v2771 = vmax.f32 %v1883, %v2515
    %v2772 = vmax.f32 %v1886, %v2516
    %v2773 = vmax.f32 %v1891, %v2517
    %v2774 = vmax.f32 %v1894, %v2518
    %v2775 = vmax.f32 %v1899, %v2519
    %v2776 = vmax.f32 %v1902, %v2520
    %v2777 = vmax.f32 %v1907, %v2521
    %v2778 = vmax.f32 %v1910, %v2522
    %v2779 = vmax.f32 %v1915, %v2523
    %v2780 = vmax.f32 %v1918, %v2524
    %v2781 = vmax.f32 %v1923, %v2525
    %v2782 = vmax.f32 %v1926, %v2526
    %v2783 = vmax.f32 %v1931, %v2527
    %v2784 = vmax.f32 %v1934, %v2528
    %v2785 = vmax.f32 %v1939, %v2529
    %v2786 = vmax.f32 %v1942, %v2530
    %v2787 = vmax.f32 %v1947, %v2531
    %v2788 = vmax.f32 %v1950, %v2532
    %v2789 = vmax.f32 %v1955, %v2533
    %v2790 = vmax.f32 %v1958, %v2534
    %v2791 = vmax.f32 %v1963, %v2535
    %v2792 = vmax.f32 %v1966, %v2536
    %v2793 = vmax.f32 %v1971, %v2537
    %v2794 = vmax.f32 %v1974, %v2538
    %v2795 = vmax.f32 %v1979, %v2539
    %v2796 = vmax.f32 %v1982, %v2540
    %v2797 = vmax.f32 %v1987, %v2541
    %v2798 = vmax.f32 %v1990, %v2542
    %v2799 = vmax.f32 %v1995, %v2543
    %v2800 = vmax.f32 %v1998, %v2544
    %v2801 = vmax.f32 %v2003, %v2545
    %v2802 = vmax.f32 %v2006, %v2546
    %v2803 = vmax.f32 %v2011, %v2547
    %v2804 = vmax.f32 %v2014, %v2548
    %v2805 = vmax.f32 %v2019, %v2549
    %v2806 = vmax.f32 %v2022, %v2550
    %v2807 = vmax.f32 %v2027, %v2551
    %v2808 = vmax.f32 %v2030, %v2552
    %v2809 = vmax.f32 %v2035, %v2553
    %v2810 = vmax.f32 %v2038, %v2554
    %v2811 = vmax.f32 %v2043, %v2555
    %v2812 = vmax.f32 %v2046, %v2556
    %v2813 = vmax.f32 %v2051, %v2557
    %v2814 = vmax.f32 %v2054, %v2558
    %v2815 = vmax.f32 %v2059, %v2559
    %v2816 = vmax.f32 %v2062, %v2560
    %v2817 = vmax.f32 %v2067, %v2561
    %v2818 = vmax.f32 %v2070, %v2562
    %v2819 = vmax.f32 %v2075, %v2563
    %v2820 = vmax.f32 %v2078, %v2564
    %v2821 = vmax.f32 %v2083, %v2565
    %v2822 = vmax.f32 %v2086, %v2566
    %v2823 = vmax.f32 %v2091, %v2567
    %v2824 = vmax.f32 %v2094, %v2568
    %v2825 = vmax.f32 %v2099, %v2569
    %v2826 = vmax.f32 %v2102, %v2570
    %v2827 = vmax.f32 %v2107, %v2571
    %v2828 = vmax.f32 %v2110, %v2572
    %v2829 = vmax.f32 %v2115, %v2573
    %v2830 = vmax.f32 %v2118, %v2574
    %v2831 = vmax.f32 %v2123, %v2575
    %v2832 = vmax.f32 %v2126, %v2576
    %v2833 = vmax.f32 %v2131, %v2577
    %v2834 = vmax.f32 %v2134, %v2578
    %v2835 = vmax.f32 %v2139, %v2579
    %v2836 = vmax.f32 %v2142, %v2580
    %v2837 = vmax.f32 %v2147, %v2581
    %v2838 = vmax.f32 %v2150, %v2582
    %v2839 = vmax.f32 %v2155, %v2583
    %v2840 = vmax.f32 %v2158, %v2584
    %v2841 = vmax.f32 %v2163, %v2585
    %v2842 = vmax.f32 %v2166, %v2586
    %v2843 = vmax.f32 %v2171, %v2587
    %v2844 = vmax.f32 %v2174, %v2588
    %v2845 = vmax.f32 %v2179, %v2589
    %v2846 = vmax.f32 %v2182, %v2590
    %v2847 = vmax.f32 %v2187, %v2591
    %v2848 = vmax.f32 %v2190, %v2592
    %v2849 = vmax.f32 %v2195, %v2593
    %v2850 = vmax.f32 %v2198, %v2594
    %v2851 = vmax.f32 %v2203, %v2595
    %v2852 = vmax.f32 %v2206, %v2596
    %v2853 = vmax.f32 %v2211, %v2597
    %v2854 = vmax.f32 %v2214, %v2598
    %v2855 = vmax.f32 %v2219, %v2599
    %v2856 = vmax.f32 %v2222, %v2600
    %v2857 = vmax.f32 %v2227, %v2601
    %v2858 = vmax.f32 %v2230, %v2602
    %v2859 = vmax.f32 %v2235, %v2603
    %v2860 = vmax.f32 %v2238, %v2604
    %v2861 = vmax.f32 %v2243, %v2605
    %v2862 = vmax.f32 %v2246, %v2606
    %v2863 = vmax.f32 %v2251, %v2607
    %v2864 = vmax.f32 %v2254, %v2608
    %v2865 = vmax.f32 %v2259, %v2609
    %v2866 = vmax.f32 %v2262, %v2610
    %v2867 = vmax.f32 %v2267, %v2611
    %v2868 = vmax.f32 %v2270, %v2612
    %v2869 = vmax.f32 %v2275, %v2613
    %v2870 = vmax.f32 %v2278, %v2614
    %v2871 = vmax.f32 %v2283, %v2615
    %v2872 = vmax.f32 %v2286, %v2616
    %v2873 = vmax.f32 %v2291, %v2617
    %v2874 = vmax.f32 %v2294, %v2618
    %v2875 = vmax.f32 %v2299, %v2619
    %v2876 = vmax.f32 %v2302, %v2620
    %v2877 = vmax.f32 %v2307, %v2621
    %v2878 = vmax.f32 %v2310, %v2622
    %v2879 = vmax.f32 %v2315, %v2623
    %v2880 = vmax.f32 %v2318, %v2624
    %v2881 = vmax.f32 %v2323, %v2625
    %v2882 = vmax.f32 %v2326, %v2626
    %v2883 = vmax.f32 %v2331, %v2627
    %v2884 = vmax.f32 %v2334, %v2628
    %v2885 = vmax.f32 %v2339, %v2629
    %v2886 = vmax.f32 %v2342, %v2630
    %v2887 = vmax.f32 %v2347, %v2631
    %v2888 = vmax.f32 %v2350, %v2632
    %v2889 = vmax.f32 %v2355, %v2633
    %v2890 = vmax.f32 %v2358, %v2634
    %v2891 = vmax.f32 %v2363, %v2635
    %v2892 = vmax.f32 %v2366, %v2636
    %v2893 = vmax.f32 %v2371, %v2637
    %v2894 = vmax.f32 %v2374, %v2638
    %v2895 = vmax.f32 %v2379, %v2639
    %v2896 = vmax.f32 %v2382, %v2640
    %2897 = vst [vmem:[#allocation2] sm:$0xff] %v2641
    %2898 = vst [vmem:[#allocation2 + $0x8] sm:$0xff] %v2642
    %2899 = vst [vmem:[#allocation2 + $0x10] sm:$0xff] %v2643
    %2900 = vst [vmem:[#allocation2 + $0x18] sm:$0xff] %v2644
    %2901 = vst [vmem:[#allocation2 + $0x20] sm:$0xff] %v2645
    %2902 = vst [vmem:[#allocation2 + $0x28] sm:$0xff] %v2646
    %2903 = vst [vmem:[#allocation2 + $0x30] sm:$0xff] %v2647
    %2904 = vst [vmem:[#allocation2 + $0x38] sm:$0xff] %v2648
    %2905 = vst [vmem:[#allocation2 + $0x40] sm:$0xff] %v2649
    %2906 = vst [vmem:[#allocation2 + $0x48] sm:$0xff] %v2650
    %2907 = vst [vmem:[#allocation2 + $0x50] sm:$0xff] %v2651
    %2908 = vst [vmem:[#allocation2 + $0x58] sm:$0xff] %v2652
    %2909 = vst [vmem:[#allocation2 + $0x60] sm:$0xff] %v2653
    %2910 = vst [vmem:[#allocation2 + $0x68] sm:$0xff] %v2654
    %2911 = vst [vmem:[#allocation2 + $0x70] sm:$0xff] %v2655
    %2912 = vst [vmem:[#allocation2 + $0x78] sm:$0xff] %v2656
    %2913 = vst [vmem:[#allocation2 + $0x80] sm:$0xff] %v2657
    %2914 = vst [vmem:[#allocation2 + $0x88] sm:$0xff] %v2658
    %2915 = vst [vmem:[#allocation2 + $0x90] sm:$0xff] %v2659
    %2916 = vst [vmem:[#allocation2 + $0x98] sm:$0xff] %v2660
    %2917 = vst [vmem:[#allocation2 + $0xa0] sm:$0xff] %v2661
    %2918 = vst [vmem:[#allocation2 + $0xa8] sm:$0xff] %v2662
    %2919 = vst [vmem:[#allocation2 + $0xb0] sm:$0xff] %v2663
    %2920 = vst [vmem:[#allocation2 + $0xb8] sm:$0xff] %v2664
    %2921 = vst [vmem:[#allocation2 + $0xc0] sm:$0xff] %v2665
    %2922 = vst [vmem:[#allocation2 + $0xc8] sm:$0xff] %v2666
    %2923 = vst [vmem:[#allocation2 + $0xd0] sm:$0xff] %v2667
    %2924 = vst [vmem:[#allocation2 + $0xd8] sm:$0xff] %v2668
    %2925 = vst [vmem:[#allocation2 + $0xe0] sm:$0xff] %v2669
    %2926 = vst [vmem:[#allocation2 + $0xe8] sm:$0xff] %v2670
    %2927 = vst [vmem:[#allocation2 + $0xf0] sm:$0xff] %v2671
    %2928 = vst [vmem:[#allocation2 + $0xf8] sm:$0xff] %v2672
    %2929 = vst [vmem:[#allocation2 + $0x100] sm:$0xff] %v2673
    %2930 = vst [vmem:[#allocation2 + $0x108] sm:$0xff] %v2674
    %2931 = vst [vmem:[#allocation2 + $0x110] sm:$0xff] %v2675
    %2932 = vst [vmem:[#allocation2 + $0x118] sm:$0xff] %v2676
    %2933 = vst [vmem:[#allocation2 + $0x120] sm:$0xff] %v2677
    %2934 = vst [vmem:[#allocation2 + $0x128] sm:$0xff] %v2678
    %2935 = vst [vmem:[#allocation2 + $0x130] sm:$0xff] %v2679
    %2936 = vst [vmem:[#allocation2 + $0x138] sm:$0xff] %v2680
    %2937 = vst [vmem:[#allocation2 + $0x140] sm:$0xff] %v2681
    %2938 = vst [vmem:[#allocation2 + $0x148] sm:$0xff] %v2682
    %2939 = vst [vmem:[#allocation2 + $0x150] sm:$0xff] %v2683
    %2940 = vst [vmem:[#allocation2 + $0x158] sm:$0xff] %v2684
    %2941 = vst [vmem:[#allocation2 + $0x160] sm:$0xff] %v2685
    %2942 = vst [vmem:[#allocation2 + $0x168] sm:$0xff] %v2686
    %2943 = vst [vmem:[#allocation2 + $0x170] sm:$0xff] %v2687
    %2944 = vst [vmem:[#allocation2 + $0x178] sm:$0xff] %v2688
    %2945 = vst [vmem:[#allocation2 + $0x180] sm:$0xff] %v2689
    %2946 = vst [vmem:[#allocation2 + $0x188] sm:$0xff] %v2690
    %2947 = vst [vmem:[#allocation2 + $0x190] sm:$0xff] %v2691
    %2948 = vst [vmem:[#allocation2 + $0x198] sm:$0xff] %v2692
    %2949 = vst [vmem:[#allocation2 + $0x1a0] sm:$0xff] %v2693
    %2950 = vst [vmem:[#allocation2 + $0x1a8] sm:$0xff] %v2694
    %2951 = vst [vmem:[#allocation2 + $0x1b0] sm:$0xff] %v2695
    %2952 = vst [vmem:[#allocation2 + $0x1b8] sm:$0xff] %v2696
    %2953 = vst [vmem:[#allocation2 + $0x1c0] sm:$0xff] %v2697
    %2954 = vst [vmem:[#allocation2 + $0x1c8] sm:$0xff] %v2698
    %2955 = vst [vmem:[#allocation2 + $0x1d0] sm:$0xff] %v2699
    %2956 = vst [vmem:[#allocation2 + $0x1d8] sm:$0xff] %v2700
    %2957 = vst [vmem:[#allocation2 + $0x1e0] sm:$0xff] %v2701
    %2958 = vst [vmem:[#allocation2 + $0x1e8] sm:$0xff] %v2702
    %2959 = vst [vmem:[#allocation2 + $0x1f0] sm:$0xff] %v2703
    %2960 = vst [vmem:[#allocation2 + $0x1f8] sm:$0xff] %v2704
    %2961 = vst [vmem:[#allocation2 + $0x200] sm:$0xff] %v2705
    %2962 = vst [vmem:[#allocation2 + $0x208] sm:$0xff] %v2706
    %2963 = vst [vmem:[#allocation2 + $0x210] sm:$0xff] %v2707
    %2964 = vst [vmem:[#allocation2 + $0x218] sm:$0xff] %v2708
    %2965 = vst [vmem:[#allocation2 + $0x220] sm:$0xff] %v2709
    %2966 = vst [vmem:[#allocation2 + $0x228] sm:$0xff] %v2710
    %2967 = vst [vmem:[#allocation2 + $0x230] sm:$0xff] %v2711
    %2968 = vst [vmem:[#allocation2 + $0x238] sm:$0xff] %v2712
    %2969 = vst [vmem:[#allocation2 + $0x240] sm:$0xff] %v2713
    %2970 = vst [vmem:[#allocation2 + $0x248] sm:$0xff] %v2714
    %2971 = vst [vmem:[#allocation2 + $0x250] sm:$0xff] %v2715
    %2972 = vst [vmem:[#allocation2 + $0x258] sm:$0xff] %v2716
    %2973 = vst [vmem:[#allocation2 + $0x260] sm:$0xff] %v2717
    %2974 = vst [vmem:[#allocation2 + $0x268] sm:$0xff] %v2718
    %2975 = vst [vmem:[#allocation2 + $0x270] sm:$0xff] %v2719
    %2976 = vst [vmem:[#allocation2 + $0x278] sm:$0xff] %v2720
    %2977 = vst [vmem:[#allocation2 + $0x280] sm:$0xff] %v2721
    %2978 = vst [vmem:[#allocation2 + $0x288] sm:$0xff] %v2722
    %2979 = vst [vmem:[#allocation2 + $0x290] sm:$0xff] %v2723
    %2980 = vst [vmem:[#allocation2 + $0x298] sm:$0xff] %v2724
    %2981 = vst [vmem:[#allocation2 + $0x2a0] sm:$0xff] %v2725
    %2982 = vst [vmem:[#allocation2 + $0x2a8] sm:$0xff] %v2726
    %2983 = vst [vmem:[#allocation2 + $0x2b0] sm:$0xff] %v2727
    %2984 = vst [vmem:[#allocation2 + $0x2b8] sm:$0xff] %v2728
    %2985 = vst [vmem:[#allocation2 + $0x2c0] sm:$0xff] %v2729
    %2986 = vst [vmem:[#allocation2 + $0x2c8] sm:$0xff] %v2730
    %2987 = vst [vmem:[#allocation2 + $0x2d0] sm:$0xff] %v2731
    %2988 = vst [vmem:[#allocation2 + $0x2d8] sm:$0xff] %v2732
    %2989 = vst [vmem:[#allocation2 + $0x2e0] sm:$0xff] %v2733
    %2990 = vst [vmem:[#allocation2 + $0x2e8] sm:$0xff] %v2734
    %2991 = vst [vmem:[#allocation2 + $0x2f0] sm:$0xff] %v2735
    %2992 = vst [vmem:[#allocation2 + $0x2f8] sm:$0xff] %v2736
    %2993 = vst [vmem:[#allocation2 + $0x300] sm:$0xff] %v2737
    %2994 = vst [vmem:[#allocation2 + $0x308] sm:$0xff] %v2738
    %2995 = vst [vmem:[#allocation2 + $0x310] sm:$0xff] %v2739
    %2996 = vst [vmem:[#allocation2 + $0x318] sm:$0xff] %v2740
    %2997 = vst [vmem:[#allocation2 + $0x320] sm:$0xff] %v2741
    %2998 = vst [vmem:[#allocation2 + $0x328] sm:$0xff] %v2742
    %2999 = vst [vmem:[#allocation2 + $0x330] sm:$0xff] %v2743
    %3000 = vst [vmem:[#allocation2 + $0x338] sm:$0xff] %v2744
    %3001 = vst [vmem:[#allocation2 + $0x340] sm:$0xff] %v2745
    %3002 = vst [vmem:[#allocation2 + $0x348] sm:$0xff] %v2746
    %3003 = vst [vmem:[#allocation2 + $0x350] sm:$0xff] %v2747
    %3004 = vst [vmem:[#allocation2 + $0x358] sm:$0xff] %v2748
    %3005 = vst [vmem:[#allocation2 + $0x360] sm:$0xff] %v2749
    %3006 = vst [vmem:[#allocation2 + $0x368] sm:$0xff] %v2750
    %3007 = vst [vmem:[#allocation2 + $0x370] sm:$0xff] %v2751
    %3008 = vst [vmem:[#allocation2 + $0x378] sm:$0xff] %v2752
    %3009 = vst [vmem:[#allocation2 + $0x380] sm:$0xff] %v2753
    %3010 = vst [vmem:[#allocation2 + $0x388] sm:$0xff] %v2754
    %3011 = vst [vmem:[#allocation2 + $0x390] sm:$0xff] %v2755
    %3012 = vst [vmem:[#allocation2 + $0x398] sm:$0xff] %v2756
    %3013 = vst [vmem:[#allocation2 + $0x3a0] sm:$0xff] %v2757
    %3014 = vst [vmem:[#allocation2 + $0x3a8] sm:$0xff] %v2758
    %3015 = vst [vmem:[#allocation2 + $0x3b0] sm:$0xff] %v2759
    %3016 = vst [vmem:[#allocation2 + $0x3b8] sm:$0xff] %v2760
    %3017 = vst [vmem:[#allocation2 + $0x3c0] sm:$0xff] %v2761
    %3018 = vst [vmem:[#allocation2 + $0x3c8] sm:$0xff] %v2762
    %3019 = vst [vmem:[#allocation2 + $0x3d0] sm:$0xff] %v2763
    %3020 = vst [vmem:[#allocation2 + $0x3d8] sm:$0xff] %v2764
    %3021 = vst [vmem:[#allocation2 + $0x3e0] sm:$0xff] %v2765
    %3022 = vst [vmem:[#allocation2 + $0x3e8] sm:$0xff] %v2766
    %3023 = vst [vmem:[#allocation2 + $0x3f0] sm:$0xff] %v2767
    %3024 = vst [vmem:[#allocation2 + $0x3f8] sm:$0xff] %v2768
    %3025 = vst [vmem:[#allocation2 + $0x400] sm:$0xff] %v2769
    %3026 = vst [vmem:[#allocation2 + $0x408] sm:$0xff] %v2770
    %3027 = vst [vmem:[#allocation2 + $0x410] sm:$0xff] %v2771
    %3028 = vst [vmem:[#allocation2 + $0x418] sm:$0xff] %v2772
    %3029 = vst [vmem:[#allocation2 + $0x420] sm:$0xff] %v2773
    %3030 = vst [vmem:[#allocation2 + $0x428] sm:$0xff] %v2774
    %3031 = vst [vmem:[#allocation2 + $0x430] sm:$0xff] %v2775
    %3032 = vst [vmem:[#allocation2 + $0x438] sm:$0xff] %v2776
    %3033 = vst [vmem:[#allocation2 + $0x440] sm:$0xff] %v2777
    %3034 = vst [vmem:[#allocation2 + $0x448] sm:$0xff] %v2778
    %3035 = vst [vmem:[#allocation2 + $0x450] sm:$0xff] %v2779
    %3036 = vst [vmem:[#allocation2 + $0x458] sm:$0xff] %v2780
    %3037 = vst [vmem:[#allocation2 + $0x460] sm:$0xff] %v2781
    %3038 = vst [vmem:[#allocation2 + $0x468] sm:$0xff] %v2782
    %3039 = vst [vmem:[#allocation2 + $0x470] sm:$0xff] %v2783
    %3040 = vst [vmem:[#allocation2 + $0x478] sm:$0xff] %v2784
    %3041 = vst [vmem:[#allocation2 + $0x480] sm:$0xff] %v2785
    %3042 = vst [vmem:[#allocation2 + $0x488] sm:$0xff] %v2786
    %3043 = vst [vmem:[#allocation2 + $0x490] sm:$0xff] %v2787
    %3044 = vst [vmem:[#allocation2 + $0x498] sm:$0xff] %v2788
    %3045 = vst [vmem:[#allocation2 + $0x4a0] sm:$0xff] %v2789
    %3046 = vst [vmem:[#allocation2 + $0x4a8] sm:$0xff] %v2790
    %3047 = vst [vmem:[#allocation2 + $0x4b0] sm:$0xff] %v2791
    %3048 = vst [vmem:[#allocation2 + $0x4b8] sm:$0xff] %v2792
    %3049 = vst [vmem:[#allocation2 + $0x4c0] sm:$0xff] %v2793
    %3050 = vst [vmem:[#allocation2 + $0x4c8] sm:$0xff] %v2794
    %3051 = vst [vmem:[#allocation2 + $0x4d0] sm:$0xff] %v2795
    %3052 = vst [vmem:[#allocation2 + $0x4d8] sm:$0xff] %v2796
    %3053 = vst [vmem:[#allocation2 + $0x4e0] sm:$0xff] %v2797
    %3054 = vst [vmem:[#allocation2 + $0x4e8] sm:$0xff] %v2798
    %3055 = vst [vmem:[#allocation2 + $0x4f0] sm:$0xff] %v2799
    %3056 = vst [vmem:[#allocation2 + $0x4f8] sm:$0xff] %v2800
    %3057 = vst [vmem:[#allocation2 + $0x500] sm:$0xff] %v2801
    %3058 = vst [vmem:[#allocation2 + $0x508] sm:$0xff] %v2802
    %3059 = vst [vmem:[#allocation2 + $0x510] sm:$0xff] %v2803
    %3060 = vst [vmem:[#allocation2 + $0x518] sm:$0xff] %v2804
    %3061 = vst [vmem:[#allocation2 + $0x520] sm:$0xff] %v2805
    %3062 = vst [vmem:[#allocation2 + $0x528] sm:$0xff] %v2806
    %3063 = vst [vmem:[#allocation2 + $0x530] sm:$0xff] %v2807
    %3064 = vst [vmem:[#allocation2 + $0x538] sm:$0xff] %v2808
    %3065 = vst [vmem:[#allocation2 + $0x540] sm:$0xff] %v2809
    %3066 = vst [vmem:[#allocation2 + $0x548] sm:$0xff] %v2810
    %3067 = vst [vmem:[#allocation2 + $0x550] sm:$0xff] %v2811
    %3068 = vst [vmem:[#allocation2 + $0x558] sm:$0xff] %v2812
    %3069 = vst [vmem:[#allocation2 + $0x560] sm:$0xff] %v2813
    %3070 = vst [vmem:[#allocation2 + $0x568] sm:$0xff] %v2814
    %3071 = vst [vmem:[#allocation2 + $0x570] sm:$0xff] %v2815
    %3072 = vst [vmem:[#allocation2 + $0x578] sm:$0xff] %v2816
    %3073 = vst [vmem:[#allocation2 + $0x580] sm:$0xff] %v2817
    %3074 = vst [vmem:[#allocation2 + $0x588] sm:$0xff] %v2818
    %3075 = vst [vmem:[#allocation2 + $0x590] sm:$0xff] %v2819
    %3076 = vst [vmem:[#allocation2 + $0x598] sm:$0xff] %v2820
    %3077 = vst [vmem:[#allocation2 + $0x5a0] sm:$0xff] %v2821
    %3078 = vst [vmem:[#allocation2 + $0x5a8] sm:$0xff] %v2822
    %3079 = vst [vmem:[#allocation2 + $0x5b0] sm:$0xff] %v2823
    %3080 = vst [vmem:[#allocation2 + $0x5b8] sm:$0xff] %v2824
    %3081 = vst [vmem:[#allocation2 + $0x5c0] sm:$0xff] %v2825
    %3082 = vst [vmem:[#allocation2 + $0x5c8] sm:$0xff] %v2826
    %3083 = vst [vmem:[#allocation2 + $0x5d0] sm:$0xff] %v2827
    %3084 = vst [vmem:[#allocation2 + $0x5d8] sm:$0xff] %v2828
    %3085 = vst [vmem:[#allocation2 + $0x5e0] sm:$0xff] %v2829
    %3086 = vst [vmem:[#allocation2 + $0x5e8] sm:$0xff] %v2830
    %3087 = vst [vmem:[#allocation2 + $0x5f0] sm:$0xff] %v2831
    %3088 = vst [vmem:[#allocation2 + $0x5f8] sm:$0xff] %v2832
    %3089 = vst [vmem:[#allocation2 + $0x600] sm:$0xff] %v2833
    %3090 = vst [vmem:[#allocation2 + $0x608] sm:$0xff] %v2834
    %3091 = vst [vmem:[#allocation2 + $0x610] sm:$0xff] %v2835
    %3092 = vst [vmem:[#allocation2 + $0x618] sm:$0xff] %v2836
    %3093 = vst [vmem:[#allocation2 + $0x620] sm:$0xff] %v2837
    %3094 = vst [vmem:[#allocation2 + $0x628] sm:$0xff] %v2838
    %3095 = vst [vmem:[#allocation2 + $0x630] sm:$0xff] %v2839
    %3096 = vst [vmem:[#allocation2 + $0x638] sm:$0xff] %v2840
    %3097 = vst [vmem:[#allocation2 + $0x640] sm:$0xff] %v2841
    %3098 = vst [vmem:[#allocation2 + $0x648] sm:$0xff] %v2842
    %3099 = vst [vmem:[#allocation2 + $0x650] sm:$0xff] %v2843
    %3100 = vst [vmem:[#allocation2 + $0x658] sm:$0xff] %v2844
    %3101 = vst [vmem:[#allocation2 + $0x660] sm:$0xff] %v2845
    %3102 = vst [vmem:[#allocation2 + $0x668] sm:$0xff] %v2846
    %3103 = vst [vmem:[#allocation2 + $0x670] sm:$0xff] %v2847
    %3104 = vst [vmem:[#allocation2 + $0x678] sm:$0xff] %v2848
    %3105 = vst [vmem:[#allocation2 + $0x680] sm:$0xff] %v2849
    %3106 = vst [vmem:[#allocation2 + $0x688] sm:$0xff] %v2850
    %3107 = vst [vmem:[#allocation2 + $0x690] sm:$0xff] %v2851
    %3108 = vst [vmem:[#allocation2 + $0x698] sm:$0xff] %v2852
    %3109 = vst [vmem:[#allocation2 + $0x6a0] sm:$0xff] %v2853
    %3110 = vst [vmem:[#allocation2 + $0x6a8] sm:$0xff] %v2854
    %3111 = vst [vmem:[#allocation2 + $0x6b0] sm:$0xff] %v2855
    %3112 = vst [vmem:[#allocation2 + $0x6b8] sm:$0xff] %v2856
    %3113 = vst [vmem:[#allocation2 + $0x6c0] sm:$0xff] %v2857
    %3114 = vst [vmem:[#allocation2 + $0x6c8] sm:$0xff] %v2858
    %3115 = vst [vmem:[#allocation2 + $0x6d0] sm:$0xff] %v2859
    %3116 = vst [vmem:[#allocation2 + $0x6d8] sm:$0xff] %v2860
    %3117 = vst [vmem:[#allocation2 + $0x6e0] sm:$0xff] %v2861
    %3118 = vst [vmem:[#allocation2 + $0x6e8] sm:$0xff] %v2862
    %3119 = vst [vmem:[#allocation2 + $0x6f0] sm:$0xff] %v2863
    %3120 = vst [vmem:[#allocation2 + $0x6f8] sm:$0xff] %v2864
    %3121 = vst [vmem:[#allocation2 + $0x700] sm:$0xff] %v2865
    %3122 = vst [vmem:[#allocation2 + $0x708] sm:$0xff] %v2866
    %3123 = vst [vmem:[#allocation2 + $0x710] sm:$0xff] %v2867
    %3124 = vst [vmem:[#allocation2 + $0x718] sm:$0xff] %v2868
    %3125 = vst [vmem:[#allocation2 + $0x720] sm:$0xff] %v2869
    %3126 = vst [vmem:[#allocation2 + $0x728] sm:$0xff] %v2870
    %3127 = vst [vmem:[#allocation2 + $0x730] sm:$0xff] %v2871
    %3128 = vst [vmem:[#allocation2 + $0x738] sm:$0xff] %v2872
    %3129 = vst [vmem:[#allocation2 + $0x740] sm:$0xff] %v2873
    %3130 = vst [vmem:[#allocation2 + $0x748] sm:$0xff] %v2874
    %3131 = vst [vmem:[#allocation2 + $0x750] sm:$0xff] %v2875
    %3132 = vst [vmem:[#allocation2 + $0x758] sm:$0xff] %v2876
    %3133 = vst [vmem:[#allocation2 + $0x760] sm:$0xff] %v2877
    %3134 = vst [vmem:[#allocation2 + $0x768] sm:$0xff] %v2878
    %3135 = vst [vmem:[#allocation2 + $0x770] sm:$0xff] %v2879
    %3136 = vst [vmem:[#allocation2 + $0x778] sm:$0xff] %v2880
    %3137 = vst [vmem:[#allocation2 + $0x780] sm:$0xff] %v2881
    %3138 = vst [vmem:[#allocation2 + $0x788] sm:$0xff] %v2882
    %3139 = vst [vmem:[#allocation2 + $0x790] sm:$0xff] %v2883
    %3140 = vst [vmem:[#allocation2 + $0x798] sm:$0xff] %v2884
    %3141 = vst [vmem:[#allocation2 + $0x7a0] sm:$0xff] %v2885
    %3142 = vst [vmem:[#allocation2 + $0x7a8] sm:$0xff] %v2886
    %3143 = vst [vmem:[#allocation2 + $0x7b0] sm:$0xff] %v2887
    %3144 = vst [vmem:[#allocation2 + $0x7b8] sm:$0xff] %v2888
    %3145 = vst [vmem:[#allocation2 + $0x7c0] sm:$0xff] %v2889
    %3146 = vst [vmem:[#allocation2 + $0x7c8] sm:$0xff] %v2890
    %3147 = vst [vmem:[#allocation2 + $0x7d0] sm:$0xff] %v2891
    %3148 = vst [vmem:[#allocation2 + $0x7d8] sm:$0xff] %v2892
    %3149 = vst [vmem:[#allocation2 + $0x7e0] sm:$0xff] %v2893
    %3150 = vst [vmem:[#allocation2 + $0x7e8] sm:$0xff] %v2894
    %3151 = vst [vmem:[#allocation2 + $0x7f0] sm:$0xff] %v2895
    %3152 = vst [vmem:[#allocation2 + $0x7f8] sm:$0xff] %v2896
    // Predicated region
    $region14: #{tpu_custom_call.1} parent=1 // pred_check
      _
    $region15: #{tpu_custom_call.1} parent=1 // pred_check_branch
      %3154 = sbr.rel (0) target = $region17
    $region16: #{tpu_custom_call.1} parent=1 // pred_region
      %s3156 = ssub.s32 32768, 32768
      %3157 = vsyncadd [#allocation3], %s3156
      %s3158 = sshll.u32 [#allocation2], 4
      %s3159 = int_to_ptr.vmem [resolvable:$true] %s3158
      %3164 = dma.vmem_to_hbm [thread:$0]  %s3159, 32768, %s3, [#allocation3], 128, 128, 8
    $region17: #{tpu_custom_call.1} parent=1 // pred_fallthru
      _
    // Predicated region
    $region18: #{tpu_custom_call.1} parent=1 // pred_check
      _
    $region19: #{tpu_custom_call.1} parent=1 // pred_check_branch
      %3166 = sbr.rel (0) target = $region21
    $region20: #{tpu_custom_call.1} parent=1 // pred_region
      %3167 = dma.done [#allocation3], 32768
    $region21: #{tpu_custom_call.1} parent=1 // pred_fallthru
      _
    %3168 = vsyncpa [#allocation3], 1

</llo_original>
